<compile_context>
chip_gen: v6e
topology: v6e:2x2x1
jax: 0.10.0
libtpu: 0.0.40
codegen_flags: <defaults>
</compile_context>

<pallas_src>
import functools

import jax
import jax.numpy as jnp
from jax.experimental import pallas as pl
from jax.experimental.pallas import tpu as pltpu

LANE = 128


def _round_up(x, m):
    return (x + m - 1) // m * m


def _pad2(x, rows, cols):
    pr, pc = rows - x.shape[0], cols - x.shape[1]
    if pr == 0 and pc == 0:
        return x
    return jnp.pad(x, ((0, pr), (0, pc)))


def _pick_tile(n):
    """Row-tile size: MXU-sized (256) for larger graphs, but always >= 2 row
    tiles when possible so the 'parallel' axis can split across both
    TensorCores on v7x."""
    for t in (256, 128, 64, 32, 16, 8):
        if _round_up(n, t) // t >= 2:
            return t
    return 8


@functools.lru_cache(maxsize=None)
def _vmem_limit_bytes():
    """Generation-aware VMEM budget (v5e/v6e: 128 MiB, v7x: 64 MiB per TC)."""
    cap = 64 * 1024 * 1024                      # conservative default (v7x per TC)
    try:
        info = pltpu.get_tpu_info()
        cap = int(getattr(info, "vmem_capacity_bytes", cap)) or cap
    except Exception:
        pass
    # Leave ~16 MiB for the compiler's own scratch / pipeline buffers.
    return max(32 * 1024 * 1024, cap - 16 * 1024 * 1024)


def _fused_vmem_bytes(n_pad, f_in_pad, h1_pad, h2_pad, c_pad):
    """Conservative estimate of the fused path's VMEM working set."""
    bf, f32 = 2, 4
    io = (n_pad * n_pad * bf                                        # A (resident)
          + n_pad * f_in_pad * bf                                   # X (resident)
          + (f_in_pad * h1_pad + h1_pad * h2_pad + h2_pad * c_pad) * bf   # W1..W3
          + (h1_pad + h2_pad + c_pad) * f32                         # biases
          + n_pad * c_pad * f32)                                    # output
    scratch = n_pad * (h1_pad + h2_pad + c_pad) * bf                # Z1..Z3
    return 2 * io + scratch   # x2: assume Pallas double-buffers blocked operands


# --------------------------------------------------------------------------
# Fused 3-layer kernel: A, X, W, b resident in VMEM; Z1/Z2/Z3 in VMEM scratch.
# grid = (phase, row_tile); phases run sequentially, row tiles within a phase
# are an in-core loop (they share the Z scratch, so no megacore sharding).
# --------------------------------------------------------------------------
def _make_fused_kernel(tile, valid_cols):
    def kernel(a_ref, x_ref, w1_ref, b1_ref, w2_ref, b2_ref, w3_ref, b3_ref,
               out_ref, z1_ref, z2_ref, z3_ref):
        phase = pl.program_id(0)
        rows = pl.ds(pl.multiple_of(pl.program_id(1) * tile, tile), tile)

        @pl.when(phase == 0)                       # Z1 = X @ W1
        def _():
            z1_ref[rows, :] = jnp.dot(
                x_ref[rows, :], w1_ref[...],
                preferred_element_type=jnp.float32).astype(z1_ref.dtype)

        @pl.when(phase == 1)                       # Z2 = relu(A @ Z1 + b1) @ W2
        def _():
            h = jnp.dot(a_ref[rows, :], z1_ref[...],
                        preferred_element_type=jnp.float32)
            h = jnp.maximum(h + b1_ref[...], 0.0).astype(jnp.bfloat16)
            # dropout: identity in eval mode
            z2_ref[rows, :] = jnp.dot(
                h, w2_ref[...],
                preferred_element_type=jnp.float32).astype(z2_ref.dtype)

        @pl.when(phase == 2)                       # Z3 = relu(A @ Z2 + b2) @ W3
        def _():
            h = jnp.dot(a_ref[rows, :], z2_ref[...],
                        preferred_element_type=jnp.float32)
            h = jnp.maximum(h + b2_ref[...], 0.0).astype(jnp.bfloat16)
            # dropout: identity in eval mode
            z3_ref[rows, :] = jnp.dot(
                h, w3_ref[...],
                preferred_element_type=jnp.float32).astype(z3_ref.dtype)

        @pl.when(phase == 3)                       # out = log_softmax(A @ Z3 + b3)
        def _():
            r = jnp.dot(a_ref[rows, :], z3_ref[...],
                        preferred_element_type=jnp.float32) + b3_ref[...]
            cols = jax.lax.broadcasted_iota(jnp.int32, r.shape, 1)
            r = jnp.where(cols < valid_cols, r, -jnp.inf)
            s = r - jnp.max(r, axis=1, keepdims=True)
            lse = jnp.log(jnp.sum(jnp.exp(s), axis=1, keepdims=True))
            out_ref[rows, :] = (s - lse).astype(out_ref.dtype)

    return kernel


def _gcn_fused(a, x, w1, b1, w2, b2, w3, b3, *, valid_cols, tile, vmem_limit):
    n_pad, f_in_pad = x.shape
    h1_pad, h2_pad, c_pad = w1.shape[1], w2.shape[1], w3.shape[1]
    row_tiles = n_pad // tile
    const2 = lambda p, i: (0, 0)

    flops = 2 * n_pad * (f_in_pad * h1_pad + n_pad * h1_pad
                         + h1_pad * h2_pad + n_pad * h2_pad
                         + h2_pad * c_pad + n_pad * c_pad)
    bytes_accessed = (a.size * 2 + x.size * 2
                      + (w1.size + w2.size + w3.size) * 2
                      + (b1.size + b2.size + b3.size) * 4
                      + n_pad * c_pad * 4)
    cost = pl.CostEstimate(flops=int(flops), transcendentals=int(n_pad * c_pad),
                           bytes_accessed=int(bytes_accessed))

    return pl.pallas_call(
        _make_fused_kernel(tile, valid_cols),
        out_shape=jax.ShapeDtypeStruct((n_pad, c_pad), jnp.float32),
        grid_spec=pltpu.PrefetchScalarGridSpec(
            num_scalar_prefetch=0,
            grid=(4, row_tiles),                  # (layer phase, row tile)
            in_specs=[
                pl.BlockSpec((n_pad, n_pad), const2),       # A  (VMEM-resident)
                pl.BlockSpec((n_pad, f_in_pad), const2),    # X  (VMEM-resident)
                pl.BlockSpec((f_in_pad, h1_pad), const2),   # W1
                pl.BlockSpec((1, h1_pad), const2),          # b1
                pl.BlockSpec((h1_pad, h2_pad), const2),     # W2
                pl.BlockSpec((1, h2_pad), const2),          # b2
                pl.BlockSpec((h2_pad, c_pad), const2),      # W3
                pl.BlockSpec((1, c_pad), const2),           # b3
            ],
            out_specs=pl.BlockSpec((n_pad, c_pad), const2),
            scratch_shapes=[pltpu.VMEM((n_pad, h1_pad), jnp.bfloat16),
                            pltpu.VMEM((n_pad, h2_pad), jnp.bfloat16),
                            pltpu.VMEM((n_pad, c_pad), jnp.bfloat16)]),
        compiler_params=pltpu.CompilerParams(
            dimension_semantics=("arbitrary", "arbitrary"),
            vmem_limit_bytes=vmem_limit),
        cost_estimate=cost,
    )(a, x, w1, b1, w2, b2, w3, b3)


# --------------------------------------------------------------------------
# Streaming fallback (A too big for residency): per-layer pallas_calls,
# grid=(row_tiles,) "parallel", full-width A stripes, resident Z, no acc.
# --------------------------------------------------------------------------
def _transform_kernel(x_ref, w_ref, z_ref):
    z_ref[...] = jnp.dot(x_ref[...], w_ref[...],
                         preferred_element_type=jnp.float32).astype(z_ref.dtype)


def _transform(x, w, *, tile, vmem_limit):
    n_pad, f_in = x.shape
    f_out = w.shape[1]
    cost = pl.CostEstimate(
        flops=2 * n_pad * f_in * f_out, transcendentals=0,
        bytes_accessed=int(x.size * 2 + w.size * 2 + n_pad * f_out * 2))
    return pl.pallas_call(
        _transform_kernel,
        out_shape=jax.ShapeDtypeStruct((n_pad, f_out), jnp.bfloat16),
        grid_spec=pltpu.PrefetchScalarGridSpec(
            num_scalar_prefetch=0,
            grid=(n_pad // tile,),
            in_specs=[pl.BlockSpec((tile, f_in), lambda i: (i, 0)),
                      pl.BlockSpec((f_in, f_out), lambda i: (0, 0))],
            out_specs=pl.BlockSpec((tile, f_out), lambda i: (i, 0))),
        compiler_params=pltpu.CompilerParams(
            dimension_semantics=("parallel",),
            vmem_limit_bytes=vmem_limit),
        cost_estimate=cost,
    )(x, w)


def _make_agg_kernel(has_w_next, activation, valid_cols):
    def kernel(*refs):
        if has_w_next:
            a_ref, z_ref, b_ref, w_ref, out_ref = refs
        else:
            a_ref, z_ref, b_ref, out_ref = refs

        r = jnp.dot(a_ref[...], z_ref[...], preferred_element_type=jnp.float32)
        r = r + b_ref[...]
        if activation == "relu":
            r = jnp.maximum(r, 0.0)
        else:   # log_softmax (final layer): mask padded class columns
            cols = jax.lax.broadcasted_iota(jnp.int32, r.shape, 1)
            r = jnp.where(cols < valid_cols, r, -jnp.inf)
            s = r - jnp.max(r, axis=1, keepdims=True)
            r = s - jnp.log(jnp.sum(jnp.exp(s), axis=1, keepdims=True))
        if has_w_next:
            # fused pre-transform of the NEXT layer: Z_next = relu(...) @ W_next
            # dropout: identity in eval mode
            r = jnp.dot(r.astype(jnp.bfloat16), w_ref[...],
                        preferred_element_type=jnp.float32)
        out_ref[...] = r.astype(out_ref.dtype)

    return kernel


def _aggregate(a, z, b, w_next, *, activation, tile, vmem_limit,
               valid_cols=0, out_dtype=jnp.bfloat16):
    n_pad = a.shape[0]
    f_mid = z.shape[1]
    f_out = w_next.shape[1] if w_next is not None else b.shape[1]
    row_tiles = n_pad // tile

    in_specs = [
        pl.BlockSpec((tile, n_pad), lambda i: (i, 0)),    # A row stripe, full K
        pl.BlockSpec((n_pad, f_mid), lambda i: (0, 0)),   # Z resident (one DMA)
        pl.BlockSpec((1, b.shape[1]), lambda i: (0, 0)),  # bias resident
    ]
    operands = [a, z, b]
    if w_next is not None:
        in_specs.append(pl.BlockSpec(w_next.shape, lambda i: (0, 0)))
        operands.append(w_next)

    flops = 2 * n_pad * n_pad * f_mid
    if w_next is not None:
        flops += 2 * n_pad * f_mid * f_out
    trans = n_pad * f_out if activation == "log_softmax" else 0
    bytes_accessed = (a.size * 2 + z.size * 2 + b.size * 4
                      + (w_next.size * 2 if w_next is not None else 0)
                      + n_pad * f_out * jnp.dtype(out_dtype).itemsize)
    cost = pl.CostEstimate(flops=int(flops), transcendentals=int(trans),
                           bytes_accessed=int(bytes_accessed))

    return pl.pallas_call(
        _make_agg_kernel(w_next is not None, activation, valid_cols),
        out_shape=jax.ShapeDtypeStruct((n_pad, f_out), out_dtype),
        grid_spec=pltpu.PrefetchScalarGridSpec(
            num_scalar_prefetch=0,
            grid=(row_tiles,),
            in_specs=in_specs,
            out_specs=pl.BlockSpec((tile, f_out), lambda i: (i, 0))),
        compiler_params=pltpu.CompilerParams(
            dimension_semantics=("parallel",),
            vmem_limit_bytes=vmem_limit),
        cost_estimate=cost,
    )(*operands)


def _gcn_streaming(a, x, w1, b1, w2, b2, w3, b3, *, valid_cols, tile, vmem_limit):
    z1 = _transform(x, w1, tile=tile, vmem_limit=vmem_limit)
    z2 = _aggregate(a, z1, b1, w2, activation="relu",
                    tile=tile, vmem_limit=vmem_limit)
    z3 = _aggregate(a, z2, b2, w3, activation="relu",
                    tile=tile, vmem_limit=vmem_limit)
    return _aggregate(a, z3, b3, None, activation="log_softmax",
                      valid_cols=valid_cols, out_dtype=jnp.float32,
                      tile=tile, vmem_limit=vmem_limit)


# --------------------------------------------------------------------------
# Top-level forward
# --------------------------------------------------------------------------
@functools.partial(jax.jit, static_argnames=("force_streaming",))
def gcn_forward(a_hat, x, params, force_streaming=False):
    w1, b1, w2, b2, w3, b3 = params
    n = x.shape[0]
    c = w3.shape[1]

    tile = _pick_tile(n)
    n_pad = _round_up(n, max(tile, LANE))
    f_in_pad = _round_up(x.shape[1], LANE)
    h1_pad = _round_up(w1.shape[1], LANE)
    h2_pad = _round_up(w2.shape[1], LANE)
    c_pad = _round_up(c, LANE)

    a_p = _pad2(a_hat, n_pad, n_pad).astype(jnp.bfloat16)
    x_p = _pad2(x, n_pad, f_in_pad).astype(jnp.bfloat16)
    w1_p = _pad2(w1, f_in_pad, h1_pad).astype(jnp.bfloat16)
    w2_p = _pad2(w2, h1_pad, h2_pad).astype(jnp.bfloat16)
    w3_p = _pad2(w3, h2_pad, c_pad).astype(jnp.bfloat16)
    b1_p = _pad2(b1.reshape(1, -1), 1, h1_pad).astype(jnp.float32)
    b2_p = _pad2(b2.reshape(1, -1), 1, h2_pad).astype(jnp.float32)
    b3_p = _pad2(b3.reshape(1, -1), 1, c_pad).astype(jnp.float32)

    vmem_limit = _vmem_limit_bytes()
    fits = _fused_vmem_bytes(n_pad, f_in_pad, h1_pad, h2_pad, c_pad) \
        <= vmem_limit - 8 * 1024 * 1024

    if fits and not force_streaming:
        out = _gcn_fused(a_p, x_p, w1_p, b1_p, w2_p, b2_p, w3_p, b3_p,
                         valid_cols=c, tile=tile, vmem_limit=vmem_limit)
    else:
        out = _gcn_streaming(a_p, x_p, w1_p, b1_p, w2_p, b2_p, w3_p, b3_p,
                             valid_cols=c, tile=tile, vmem_limit=vmem_limit)
    return out[:n, :c]


# --------------------------------------------------------------------------
# Preprocessing / init / reference
# --------------------------------------------------------------------------
def build_norm_adj(edge_index, num_nodes):
    """Dense D^-1/2 (A + I) D^-1/2 from a [2, E] edge_index (PyG GCNConv norm)."""
    src, dst = edge_index[0], edge_index[1]
    a = jnp.zeros((num_nodes, num_nodes), jnp.float32)
    a = a.at[dst, src].set(1.0)                       # message src -> dst
    a = a + jnp.eye(num_nodes, dtype=jnp.float32)     # self-loops
    deg = jnp.sum(a, axis=1)
    d_inv_sqrt = jnp.where(deg > 0, 1.0 / jnp.sqrt(deg), 0.0)
    return a * d_inv_sqrt[:, None] * d_inv_sqrt[None, :]


def init_params(key, f_in, h1, h2, c):
    """Deterministic glorot-style init for the three GCNConv layers."""
    ks = jax.random.split(key, 3)

    def glorot(k, fan_in, fan_out):
        limit = jnp.sqrt(6.0 / (fan_in + fan_out))
        return jax.random.uniform(k, (fan_in, fan_out), jnp.float32,
                                  minval=-limit, maxval=limit)

    w1 = glorot(ks[0], f_in, h1)
    w2 = glorot(ks[1], h1, h2)
    w3 = glorot(ks[2], h2, c)
    b1 = jnp.zeros((1, h1), jnp.float32)
    b2 = jnp.zeros((1, h2), jnp.float32)
    b3 = jnp.zeros((1, c), jnp.float32)
    return (w1, b1, w2, b2, w3, b3)


def gcn_reference(a_hat, x, params):
    """Pure-JAX reference mirroring the kernels' bf16 cast points."""
    w1, b1, w2, b2, w3, b3 = params
    a = a_hat.astype(jnp.bfloat16)
    h = x.astype(jnp.bfloat16)

    z1 = jnp.dot(h, w1.astype(jnp.bfloat16),
                 preferred_element_type=jnp.float32).astype(jnp.bfloat16)
    h1 = jnp.maximum(jnp.dot(a, z1, preferred_element_type=jnp.float32) + b1,
                     0.0).astype(jnp.bfloat16)
    z2 = jnp.dot(h1, w2.astype(jnp.bfloat16),
                 preferred_element_type=jnp.float32).astype(jnp.bfloat16)
    h2 = jnp.maximum(jnp.dot(a, z2, preferred_element_type=jnp.float32) + b2,
                     0.0).astype(jnp.bfloat16)
    z3 = jnp.dot(h2, w3.astype(jnp.bfloat16),
                 preferred_element_type=jnp.float32).astype(jnp.bfloat16)
    r = jnp.dot(a, z3, preferred_element_type=jnp.float32) + b3
    return jax.nn.log_softmax(r, axis=1)


if __name__ == "__main__":
    # Small synthetic "Cora-like" graph (real Cora: N=2708, F=1433, C=7).
    N = 128        # number of nodes
    F_IN = 256     # num_features stand-in (> 128 so layer 1's transform matters)
    H1, H2 = 64, 32
    C = 7          # num_classes
    E = 512        # number of directed edges

    key = jax.random.PRNGKey(0)
    k_x, k_e, k_p = jax.random.split(key, 3)

    x = jax.random.normal(k_x, (N, F_IN), jnp.float32)
    edge_index = jax.random.randint(k_e, (2, E), 0, N, dtype=jnp.int32)

    a_hat = build_norm_adj(edge_index, N)
    params = init_params(k_p, F_IN, H1, H2, C)

    ref = gcn_reference(a_hat, x, params)

    out_fused = gcn_forward(a_hat, x, params)                       # A-resident fused path
    out_stream = gcn_forward(a_hat, x, params, force_streaming=True)  # per-layer streaming path
    jax.block_until_ready((out_fused, out_stream))

    for out in (out_fused, out_stream):
        assert out.shape == (N, C)
        # rows of log_softmax must exp-sum to 1
        assert bool(jnp.all(jnp.abs(jnp.sum(jnp.exp(out), axis=1) - 1.0) < 1e-3))
        # match the pure-JAX reference using the same bf16 cast points
        assert bool(jnp.max(jnp.abs(out - ref)) < 5e-2), float(jnp.max(jnp.abs(out - ref)))

    print("KERNEL_OK")
</pallas_src>

<mosaic_0001>
module attributes {stable_mosaic.version = 11 : i64} {
  func.func @kernel(%arg0: i32, %arg1: i32, %arg2: memref<128x128xbf16, #tpu.memory_space<vmem>>, %arg3: memref<128x256xbf16, #tpu.memory_space<vmem>>, %arg4: memref<256x128xbf16, #tpu.memory_space<vmem>>, %arg5: memref<1x128xf32, #tpu.memory_space<vmem>>, %arg6: memref<128x128xbf16, #tpu.memory_space<vmem>>, %arg7: memref<1x128xf32, #tpu.memory_space<vmem>>, %arg8: memref<128x128xbf16, #tpu.memory_space<vmem>>, %arg9: memref<1x128xf32, #tpu.memory_space<vmem>>, %arg10: memref<128x128xf32, #tpu.memory_space<vmem>>, %arg11: memref<128x128xbf16, #tpu.memory_space<vmem>>, %arg12: memref<128x128xbf16, #tpu.memory_space<vmem>>, %arg13: memref<128x128xbf16, #tpu.memory_space<vmem>>) attributes {dimension_semantics = [#tpu.dimension_semantics<arbitrary>, #tpu.dimension_semantics<arbitrary>], iteration_bounds = array<i64: 4, 2>, scalar_prefetch = 0 : i64, scratch_operands = 3 : i64, tpu.core_type = #tpu.core_type<tc>, window_params = [{pipeline_mode = #tpu.pipeline_mode<synchronous>, transform_indices = @transform_0, window_bounds = array<i64: 128, 128>}, {pipeline_mode = #tpu.pipeline_mode<synchronous>, transform_indices = @transform_1, window_bounds = array<i64: 128, 256>}, {pipeline_mode = #tpu.pipeline_mode<synchronous>, transform_indices = @transform_2, window_bounds = array<i64: 256, 128>}, {pipeline_mode = #tpu.pipeline_mode<synchronous>, transform_indices = @transform_3, window_bounds = array<i64: 1, 128>}, {pipeline_mode = #tpu.pipeline_mode<synchronous>, transform_indices = @transform_4, window_bounds = array<i64: 128, 128>}, {pipeline_mode = #tpu.pipeline_mode<synchronous>, transform_indices = @transform_5, window_bounds = array<i64: 1, 128>}, {pipeline_mode = #tpu.pipeline_mode<synchronous>, transform_indices = @transform_6, window_bounds = array<i64: 128, 128>}, {pipeline_mode = #tpu.pipeline_mode<synchronous>, transform_indices = @transform_7, window_bounds = array<i64: 1, 128>}, {pipeline_mode = #tpu.pipeline_mode<synchronous>, transform_indices = @transform_8, window_bounds = array<i64: 128, 128>}]} {
    %c64_i32 = arith.constant 64 : i32
    %0 = arith.muli %arg1, %c64_i32 : i32
    %1 = tpu.assume_multiple %0, 64 : i32
    %c0_i32 = arith.constant 0 : i32
    %2 = arith.cmpi eq, %arg0, %c0_i32 : i32
    %3 = arith.extui %2 : i1 to i32
    %c0_i32_0 = arith.constant 0 : i32
    %4 = arith.cmpi ne, %3, %c0_i32_0 : i32
    scf.if %4 {
      %14 = arith.index_cast %1 : i32 to index
      %c0 = arith.constant 0 : index
      %15 = vector.load %arg3[%14, %c0] : memref<128x256xbf16, #tpu.memory_space<vmem>>, vector<64x256xbf16>
      %c0_4 = arith.constant 0 : index
      %c0_5 = arith.constant 0 : index
      %16 = vector.load %arg4[%c0_4, %c0_5] : memref<256x128xbf16, #tpu.memory_space<vmem>>, vector<256x128xbf16>
      %cst = arith.constant dense<0.000000e+00> : vector<64x128xf32>
      %17 = tpu.matmul %15, %16, %cst {dimension_numbers = #tpu.dot_dimension_numbers<[1], [0], [0], [1], [0, 0, 1, 1], [], []>} : vector<64x256xbf16>, vector<256x128xbf16>, vector<64x128xf32> -> vector<64x128xf32>
      %18 = arith.truncf %17 : vector<64x128xf32> to vector<64x128xbf16>
      %19 = arith.index_cast %1 : i32 to index
      %c0_6 = arith.constant 0 : index
      %20 = vector.load %arg11[%19, %c0_6] : memref<128x128xbf16, #tpu.memory_space<vmem>>, vector<64x128xbf16>
      tpu.vector_store %arg11[%19, %c0_6], %18 {strides = array<i32>} : memref<128x128xbf16, #tpu.memory_space<vmem>>, vector<64x128xbf16>,
    } else {
    }
    %c1_i32 = arith.constant 1 : i32
    %5 = arith.cmpi eq, %arg0, %c1_i32 : i32
    %6 = arith.extui %5 : i1 to i32
    %c0_i32_1 = arith.constant 0 : i32
    %7 = arith.cmpi ne, %6, %c0_i32_1 : i32
    scf.if %7 {
      %14 = arith.index_cast %1 : i32 to index
      %c0 = arith.constant 0 : index
      %15 = vector.load %arg2[%14, %c0] : memref<128x128xbf16, #tpu.memory_space<vmem>>, vector<64x128xbf16>
      %c0_4 = arith.constant 0 : index
      %c0_5 = arith.constant 0 : index
      %16 = vector.load %arg11[%c0_4, %c0_5] : memref<128x128xbf16, #tpu.memory_space<vmem>>, vector<128x128xbf16>
      %cst = arith.constant dense<0.000000e+00> : vector<64x128xf32>
      %17 = tpu.matmul %15, %16, %cst {dimension_numbers = #tpu.dot_dimension_numbers<[1], [0], [0], [1], [0, 0, 1, 1], [], []>} : vector<64x128xbf16>, vector<128x128xbf16>, vector<64x128xf32> -> vector<64x128xf32>
      %c0_6 = arith.constant 0 : index
      %c0_7 = arith.constant 0 : index
      %18 = vector.load %arg5[%c0_6, %c0_7] : memref<1x128xf32, #tpu.memory_space<vmem>>, vector<1x128xf32>
      %19 = vector.broadcast %18 : vector<1x128xf32> to vector<64x128xf32>
      %20 = arith.addf %17, %19 : vector<64x128xf32>
      %cst_8 = arith.constant 0.000000e+00 : f32
      %21 = vector.broadcast %cst_8 : f32 to vector<64x128xf32>
      %22 = arith.maximumf %20, %21 : vector<64x128xf32>
      %23 = arith.truncf %22 : vector<64x128xf32> to vector<64x128xbf16>
      %c0_9 = arith.constant 0 : index
      %c0_10 = arith.constant 0 : index
      %24 = vector.load %arg6[%c0_9, %c0_10] : memref<128x128xbf16, #tpu.memory_space<vmem>>, vector<128x128xbf16>
      %cst_11 = arith.constant dense<0.000000e+00> : vector<64x128xf32>
      %25 = tpu.matmul %23, %24, %cst_11 {dimension_numbers = #tpu.dot_dimension_numbers<[1], [0], [0], [1], [0, 0, 1, 1], [], []>} : vector<64x128xbf16>, vector<128x128xbf16>, vector<64x128xf32> -> vector<64x128xf32>
      %26 = arith.truncf %25 : vector<64x128xf32> to vector<64x128xbf16>
      %27 = arith.index_cast %1 : i32 to index
      %c0_12 = arith.constant 0 : index
      %28 = vector.load %arg12[%27, %c0_12] : memref<128x128xbf16, #tpu.memory_space<vmem>>, vector<64x128xbf16>
      tpu.vector_store %arg12[%27, %c0_12], %26 {strides = array<i32>} : memref<128x128xbf16, #tpu.memory_space<vmem>>, vector<64x128xbf16>,
    } else {
    }
    %c2_i32 = arith.constant 2 : i32
    %8 = arith.cmpi eq, %arg0, %c2_i32 : i32
    %9 = arith.extui %8 : i1 to i32
    %c0_i32_2 = arith.constant 0 : i32
    %10 = arith.cmpi ne, %9, %c0_i32_2 : i32
    scf.if %10 {
      %14 = arith.index_cast %1 : i32 to index
      %c0 = arith.constant 0 : index
      %15 = vector.load %arg2[%14, %c0] : memref<128x128xbf16, #tpu.memory_space<vmem>>, vector<64x128xbf16>
      %c0_4 = arith.constant 0 : index
      %c0_5 = arith.constant 0 : index
      %16 = vector.load %arg12[%c0_4, %c0_5] : memref<128x128xbf16, #tpu.memory_space<vmem>>, vector<128x128xbf16>
      %cst = arith.constant dense<0.000000e+00> : vector<64x128xf32>
      %17 = tpu.matmul %15, %16, %cst {dimension_numbers = #tpu.dot_dimension_numbers<[1], [0], [0], [1], [0, 0, 1, 1], [], []>} : vector<64x128xbf16>, vector<128x128xbf16>, vector<64x128xf32> -> vector<64x128xf32>
      %c0_6 = arith.constant 0 : index
      %c0_7 = arith.constant 0 : index
      %18 = vector.load %arg7[%c0_6, %c0_7] : memref<1x128xf32, #tpu.memory_space<vmem>>, vector<1x128xf32>
      %19 = vector.broadcast %18 : vector<1x128xf32> to vector<64x128xf32>
      %20 = arith.addf %17, %19 : vector<64x128xf32>
      %cst_8 = arith.constant 0.000000e+00 : f32
      %21 = vector.broadcast %cst_8 : f32 to vector<64x128xf32>
      %22 = arith.maximumf %20, %21 : vector<64x128xf32>
      %23 = arith.truncf %22 : vector<64x128xf32> to vector<64x128xbf16>
      %c0_9 = arith.constant 0 : index
      %c0_10 = arith.constant 0 : index
      %24 = vector.load %arg8[%c0_9, %c0_10] : memref<128x128xbf16, #tpu.memory_space<vmem>>, vector<128x128xbf16>
      %cst_11 = arith.constant dense<0.000000e+00> : vector<64x128xf32>
      %25 = tpu.matmul %23, %24, %cst_11 {dimension_numbers = #tpu.dot_dimension_numbers<[1], [0], [0], [1], [0, 0, 1, 1], [], []>} : vector<64x128xbf16>, vector<128x128xbf16>, vector<64x128xf32> -> vector<64x128xf32>
      %26 = arith.truncf %25 : vector<64x128xf32> to vector<64x128xbf16>
      %27 = arith.index_cast %1 : i32 to index
      %c0_12 = arith.constant 0 : index
      %28 = vector.load %arg13[%27, %c0_12] : memref<128x128xbf16, #tpu.memory_space<vmem>>, vector<64x128xbf16>
      tpu.vector_store %arg13[%27, %c0_12], %26 {strides = array<i32>} : memref<128x128xbf16, #tpu.memory_space<vmem>>, vector<64x128xbf16>,
    } else {
    }
    %c3_i32 = arith.constant 3 : i32
    %11 = arith.cmpi eq, %arg0, %c3_i32 : i32
    %12 = arith.extui %11 : i1 to i32
    %c0_i32_3 = arith.constant 0 : i32
    %13 = arith.cmpi ne, %12, %c0_i32_3 : i32
    scf.if %13 {
      %14 = arith.index_cast %1 : i32 to index
      %c0 = arith.constant 0 : index
      %15 = vector.load %arg2[%14, %c0] : memref<128x128xbf16, #tpu.memory_space<vmem>>, vector<64x128xbf16>
      %c0_4 = arith.constant 0 : index
      %c0_5 = arith.constant 0 : index
      %16 = vector.load %arg13[%c0_4, %c0_5] : memref<128x128xbf16, #tpu.memory_space<vmem>>, vector<128x128xbf16>
      %cst = arith.constant dense<0.000000e+00> : vector<64x128xf32>
      %17 = tpu.matmul %15, %16, %cst {dimension_numbers = #tpu.dot_dimension_numbers<[1], [0], [0], [1], [0, 0, 1, 1], [], []>} : vector<64x128xbf16>, vector<128x128xbf16>, vector<64x128xf32> -> vector<64x128xf32>
      %c0_6 = arith.constant 0 : index
      %c0_7 = arith.constant 0 : index
      %18 = vector.load %arg9[%c0_6, %c0_7] : memref<1x128xf32, #tpu.memory_space<vmem>>, vector<1x128xf32>
      %19 = vector.broadcast %18 : vector<1x128xf32> to vector<64x128xf32>
      %20 = arith.addf %17, %19 : vector<64x128xf32>
      %21 = tpu.iota {dimensions = array<i32: 1>} : vector<64x128xi32>
      %c7_i32 = arith.constant 7 : i32
      %22 = vector.broadcast %c7_i32 : i32 to vector<64x128xi32>
      %23 = arith.cmpi slt, %21, %22 : vector<64x128xi32>
      %cst_8 = arith.constant 0xFF800000 : f32
      %24 = vector.broadcast %cst_8 : f32 to vector<64x128xf32>
      %25 = arith.select %23, %20, %24 : vector<64x128xi1>, vector<64x128xf32>
      %cst_9 = arith.constant dense<0xFF800000> : vector<64xf32>
      %26 = vector.multi_reduction <maximumf>, %25, %cst_9 [1] : vector<64x128xf32> to vector<64xf32>
      %27 = vector.shape_cast %26 : vector<64xf32> to vector<64x1xf32>
      %28 = vector.broadcast %27 : vector<64x1xf32> to vector<64x128xf32>
      %29 = arith.subf %25, %28 : vector<64x128xf32>
      %30 = math.exp %29 : vector<64x128xf32>
      %cst_10 = arith.constant dense<0.000000e+00> : vector<64xf32>
      %31 = vector.multi_reduction <add>, %30, %cst_10 [1] : vector<64x128xf32> to vector<64xf32>
      %32 = vector.shape_cast %31 : vector<64xf32> to vector<64x1xf32>
      %33 = math.log %32 : vector<64x1xf32>
      %34 = vector.broadcast %33 : vector<64x1xf32> to vector<64x128xf32>
      %35 = arith.subf %29, %34 : vector<64x128xf32>
      %36 = arith.index_cast %1 : i32 to index
      %c0_11 = arith.constant 0 : index
      %37 = vector.load %arg10[%36, %c0_11] : memref<128x128xf32, #tpu.memory_space<vmem>>, vector<64x128xf32>
      tpu.vector_store %arg10[%36, %c0_11], %35 {strides = array<i32>} : memref<128x128xf32, #tpu.memory_space<vmem>>, vector<64x128xf32>,
    } else {
    }
    return
  }
  func.func @transform_0(%arg0: i32, %arg1: i32) -> (i32, i32) {
    %c0_i32 = arith.constant 0 : i32
    %c0_i32_0 = arith.constant 0 : i32
    %c0_i32_1 = arith.constant 0 : i32
    return %c0_i32, %c0_i32_0 : i32, i32
  }
  func.func @transform_1(%arg0: i32, %arg1: i32) -> (i32, i32) {
    %c0_i32 = arith.constant 0 : i32
    %c0_i32_0 = arith.constant 0 : i32
    %c0_i32_1 = arith.constant 0 : i32
    return %c0_i32, %c0_i32_0 : i32, i32
  }
  func.func @transform_2(%arg0: i32, %arg1: i32) -> (i32, i32) {
    %c0_i32 = arith.constant 0 : i32
    %c0_i32_0 = arith.constant 0 : i32
    %c0_i32_1 = arith.constant 0 : i32
    return %c0_i32, %c0_i32_0 : i32, i32
  }
  func.func @transform_3(%arg0: i32, %arg1: i32) -> (i32, i32) {
    %c0_i32 = arith.constant 0 : i32
    %c0_i32_0 = arith.constant 0 : i32
    %c0_i32_1 = arith.constant 0 : i32
    return %c0_i32, %c0_i32_0 : i32, i32
  }
  func.func @transform_4(%arg0: i32, %arg1: i32) -> (i32, i32) {
    %c0_i32 = arith.constant 0 : i32
    %c0_i32_0 = arith.constant 0 : i32
    %c0_i32_1 = arith.constant 0 : i32
    return %c0_i32, %c0_i32_0 : i32, i32
  }
  func.func @transform_5(%arg0: i32, %arg1: i32) -> (i32, i32) {
    %c0_i32 = arith.constant 0 : i32
    %c0_i32_0 = arith.constant 0 : i32
    %c0_i32_1 = arith.constant 0 : i32
    return %c0_i32, %c0_i32_0 : i32, i32
  }
  func.func @transform_6(%arg0: i32, %arg1: i32) -> (i32, i32) {
    %c0_i32 = arith.constant 0 : i32
    %c0_i32_0 = arith.constant 0 : i32
    %c0_i32_1 = arith.constant 0 : i32
    return %c0_i32, %c0_i32_0 : i32, i32
  }
  func.func @transform_7(%arg0: i32, %arg1: i32) -> (i32, i32) {
    %c0_i32 = arith.constant 0 : i32
    %c0_i32_0 = arith.constant 0 : i32
    %c0_i32_1 = arith.constant 0 : i32
    return %c0_i32, %c0_i32_0 : i32, i32
  }
  func.func @transform_8(%arg0: i32, %arg1: i32) -> (i32, i32) {
    %c0_i32 = arith.constant 0 : i32
    %c0_i32_0 = arith.constant 0 : i32
    %c0_i32_1 = arith.constant 0 : i32
    return %c0_i32, %c0_i32_0 : i32, i32
  }
}

</mosaic_0001>

<llo_original>
// kernel: gcn_forward.1
$region0: #{gcn_forward.1}
  #allocation0 [shape = 'u32[]', space=smem, size = 0x4, offset = 0x4, fixed_abs, tag = 'smem constant byte address 0x4 - core index']
  #allocation1 [shape = 'u32[144,128]{1,0:T(1,128)}', space=vmem, size = 0x12000, scoped, tag = 'internal scratch']
  #allocation2 [shape = 'bf16[128,128]{1,0:T(8,128)(2,1)}', space=vmem, size = 0x8000, scoped, tag = 'scratch operand']
  #allocation3 [shape = 'bf16[128,128]{1,0:T(8,128)(2,1)}', space=vmem, size = 0x8000, scoped, tag = 'scratch operand']
  #allocation4 [shape = 'bf16[128,128]{1,0:T(8,128)(2,1)}', space=vmem, size = 0x8000, scoped, tag = 'scratch operand']
  %s0 = inlined_call_operand.vmem [shape: bf16[128,128], index: 0, kind: input, shape index: {}]
  %s1 = inlined_call_operand.vmem [shape: bf16[128,256], index: 1, kind: input, shape index: {}]
  %s2 = inlined_call_operand.vmem [shape: bf16[256,128], index: 2, kind: input, shape index: {}]
  %s3 = inlined_call_operand.vmem [shape: f32[1,128], index: 3, kind: input, shape index: {}]
  %s4 = inlined_call_operand.vmem [shape: bf16[128,128], index: 4, kind: input, shape index: {}]
  %s5 = inlined_call_operand.vmem [shape: f32[1,128], index: 5, kind: input, shape index: {}]
  %s6 = inlined_call_operand.vmem [shape: bf16[128,128], index: 6, kind: input, shape index: {}]
  %s7 = inlined_call_operand.vmem [shape: f32[1,128], index: 7, kind: input, shape index: {}]
  %s8 = inlined_call_operand.vmem [shape: f32[128,128], index: 8, kind: output, shape index: {}]
  %s9 = sld [smem:[#allocation0]]
  $region81: #{gcn_forward.1} parent=0
    _
  %s11 = ssub.s32 1, %s9
  %s12 = scalar_select 0, %s11, %s9
  loop: start=0, step=1, limit=10
  $region2: #{gcn_forward.1} parent=0 // loop_pre_header
    _
  $region3: #{gcn_forward.1} parent=0 // loop_header
    %s14 = sphi 0, %s18
    %p15 = scmp.ge.s32.totalorder %s14, 10
    %s21 = sphi 0, %s33
    %s22 = sphi 0, %s29
    %s23 = sphi 0, %s21
    %s24 = sphi 0, %s22
    %s25 = sphi 0, %s23
    %s26 = sphi 0, %s24
    %s34 = sphi 0, %s34
    %s36 = sphi 0, %s34
    %s37 = sphi 0, %s36
    %s51 = sphi 0, %s37
    %s55 = sphi 0, %s55
    %s57 = sphi 0, %s55
    %s58 = sphi 0, %s57
    %s72 = sphi 0, %s58
    %s76 = sphi 0, %s76
    %s78 = sphi 0, %s76
    %s79 = sphi 0, %s78
    %s93 = sphi 0, %s79
    %s97 = sphi 0, %s97
    %s99 = sphi 0, %s97
    %s100 = sphi 0, %s99
    %s114 = sphi 0, %s100
    %s118 = sphi 0, %s118
    %s120 = sphi 0, %s118
    %s121 = sphi 0, %s120
    %s135 = sphi 0, %s121
    %s139 = sphi 0, %s139
    %s141 = sphi 0, %s139
    %s142 = sphi 0, %s141
    %s156 = sphi 0, %s142
    %s160 = sphi 0, %s160
    %s162 = sphi 0, %s160
    %s163 = sphi 0, %s162
    %s177 = sphi 0, %s163
    %s181 = sphi 0, %s181
    %s183 = sphi 0, %s181
    %s184 = sphi 0, %s183
    %s198 = sphi 0, %s184
    %s202 = sphi 0, %s202
    %s204 = sphi 0, %s202
    %s205 = sphi 0, %s204
    %s219 = sphi 0, %s205
  $region4: #{gcn_forward.1} parent=0 // loop_header_branch
    %17 = sbr.rel (%p15) target = $region8
  $region5: #{gcn_forward.1} parent=0 // loop_body
    %s19 = ssub.s32 %s14, 1
    %s20 = ssub.s32 %s14, 2
    %s27 = sadd.s32 1, %s22
    %p28 = scmp.ge.s32.totalorder %s27, 2
    %s29 = scalar_select %p28, 0, %s27
    %s30 = sadd.s32 1, %s21
    %s31 = scalar_select %p28, %s30, %s21
    %p32 = scmp.ge.s32.totalorder %s31, 4
    %s33 = scalar_select %p32, 0, %s31
    %s35 = sadd.s32 %s34, 1
    %p38 = scmp.eq.s32.totalorder %s14, 7
    %p39 = scmp.ne.s32.totalorder %s34, %s36
    %p40 = scmp.eq.s32.totalorder %s14, 0
    %p41 = por %p39, %p40
    %p42 = scmp.ne.s32.totalorder %s34, %s36
    %p43 = scmp.eq.s32.totalorder %s19, 7
    %p44 = por %p42, %p43
    %p45 = scmp.ne.s32.totalorder %s36, %s37
    %p46 = scmp.eq.s32.totalorder %s19, 0
    %p47 = por %p45, %p46
    %p48 = scmp.ne.s32.totalorder %s36, %s37
    %p49 = scmp.eq.s32.totalorder %s20, 7
    %p50 = por %p48, %p49
    %p52 = scmp.ne.s32.totalorder %s37, %s51
    %p53 = scmp.eq.s32.totalorder %s20, 0
    %p54 = por %p52, %p53
    %s56 = sadd.s32 %s55, 1
    %p59 = scmp.eq.s32.totalorder %s14, 7
    %p60 = scmp.ne.s32.totalorder %s55, %s57
    %p61 = scmp.eq.s32.totalorder %s14, 0
    %p62 = por %p60, %p61
    %p63 = scmp.ne.s32.totalorder %s55, %s57
    %p64 = scmp.eq.s32.totalorder %s19, 7
    %p65 = por %p63, %p64
    %p66 = scmp.ne.s32.totalorder %s57, %s58
    %p67 = scmp.eq.s32.totalorder %s19, 0
    %p68 = por %p66, %p67
    %p69 = scmp.ne.s32.totalorder %s57, %s58
    %p70 = scmp.eq.s32.totalorder %s20, 7
    %p71 = por %p69, %p70
    %p73 = scmp.ne.s32.totalorder %s58, %s72
    %p74 = scmp.eq.s32.totalorder %s20, 0
    %p75 = por %p73, %p74
    %s77 = sadd.s32 %s76, 1
    %p80 = scmp.eq.s32.totalorder %s14, 7
    %p81 = scmp.ne.s32.totalorder %s76, %s78
    %p82 = scmp.eq.s32.totalorder %s14, 0
    %p83 = por %p81, %p82
    %p84 = scmp.ne.s32.totalorder %s76, %s78
    %p85 = scmp.eq.s32.totalorder %s19, 7
    %p86 = por %p84, %p85
    %p87 = scmp.ne.s32.totalorder %s78, %s79
    %p88 = scmp.eq.s32.totalorder %s19, 0
    %p89 = por %p87, %p88
    %p90 = scmp.ne.s32.totalorder %s78, %s79
    %p91 = scmp.eq.s32.totalorder %s20, 7
    %p92 = por %p90, %p91
    %p94 = scmp.ne.s32.totalorder %s79, %s93
    %p95 = scmp.eq.s32.totalorder %s20, 0
    %p96 = por %p94, %p95
    %s98 = sadd.s32 %s97, 1
    %p101 = scmp.eq.s32.totalorder %s14, 7
    %p102 = scmp.ne.s32.totalorder %s97, %s99
    %p103 = scmp.eq.s32.totalorder %s14, 0
    %p104 = por %p102, %p103
    %p105 = scmp.ne.s32.totalorder %s97, %s99
    %p106 = scmp.eq.s32.totalorder %s19, 7
    %p107 = por %p105, %p106
    %p108 = scmp.ne.s32.totalorder %s99, %s100
    %p109 = scmp.eq.s32.totalorder %s19, 0
    %p110 = por %p108, %p109
    %p111 = scmp.ne.s32.totalorder %s99, %s100
    %p112 = scmp.eq.s32.totalorder %s20, 7
    %p113 = por %p111, %p112
    %p115 = scmp.ne.s32.totalorder %s100, %s114
    %p116 = scmp.eq.s32.totalorder %s20, 0
    %p117 = por %p115, %p116
    %s119 = sadd.s32 %s118, 1
    %p122 = scmp.eq.s32.totalorder %s14, 7
    %p123 = scmp.ne.s32.totalorder %s118, %s120
    %p124 = scmp.eq.s32.totalorder %s14, 0
    %p125 = por %p123, %p124
    %p126 = scmp.ne.s32.totalorder %s118, %s120
    %p127 = scmp.eq.s32.totalorder %s19, 7
    %p128 = por %p126, %p127
    %p129 = scmp.ne.s32.totalorder %s120, %s121
    %p130 = scmp.eq.s32.totalorder %s19, 0
    %p131 = por %p129, %p130
    %p132 = scmp.ne.s32.totalorder %s120, %s121
    %p133 = scmp.eq.s32.totalorder %s20, 7
    %p134 = por %p132, %p133
    %p136 = scmp.ne.s32.totalorder %s121, %s135
    %p137 = scmp.eq.s32.totalorder %s20, 0
    %p138 = por %p136, %p137
    %s140 = sadd.s32 %s139, 1
    %p143 = scmp.eq.s32.totalorder %s14, 7
    %p144 = scmp.ne.s32.totalorder %s139, %s141
    %p145 = scmp.eq.s32.totalorder %s14, 0
    %p146 = por %p144, %p145
    %p147 = scmp.ne.s32.totalorder %s139, %s141
    %p148 = scmp.eq.s32.totalorder %s19, 7
    %p149 = por %p147, %p148
    %p150 = scmp.ne.s32.totalorder %s141, %s142
    %p151 = scmp.eq.s32.totalorder %s19, 0
    %p152 = por %p150, %p151
    %p153 = scmp.ne.s32.totalorder %s141, %s142
    %p154 = scmp.eq.s32.totalorder %s20, 7
    %p155 = por %p153, %p154
    %p157 = scmp.ne.s32.totalorder %s142, %s156
    %p158 = scmp.eq.s32.totalorder %s20, 0
    %p159 = por %p157, %p158
    %s161 = sadd.s32 %s160, 1
    %p164 = scmp.eq.s32.totalorder %s14, 7
    %p165 = scmp.ne.s32.totalorder %s160, %s162
    %p166 = scmp.eq.s32.totalorder %s14, 0
    %p167 = por %p165, %p166
    %p168 = scmp.ne.s32.totalorder %s160, %s162
    %p169 = scmp.eq.s32.totalorder %s19, 7
    %p170 = por %p168, %p169
    %p171 = scmp.ne.s32.totalorder %s162, %s163
    %p172 = scmp.eq.s32.totalorder %s19, 0
    %p173 = por %p171, %p172
    %p174 = scmp.ne.s32.totalorder %s162, %s163
    %p175 = scmp.eq.s32.totalorder %s20, 7
    %p176 = por %p174, %p175
    %p178 = scmp.ne.s32.totalorder %s163, %s177
    %p179 = scmp.eq.s32.totalorder %s20, 0
    %p180 = por %p178, %p179
    %s182 = sadd.s32 %s181, 1
    %p185 = scmp.eq.s32.totalorder %s14, 7
    %p186 = scmp.ne.s32.totalorder %s181, %s183
    %p187 = scmp.eq.s32.totalorder %s14, 0
    %p188 = por %p186, %p187
    %p189 = scmp.ne.s32.totalorder %s181, %s183
    %p190 = scmp.eq.s32.totalorder %s19, 7
    %p191 = por %p189, %p190
    %p192 = scmp.ne.s32.totalorder %s183, %s184
    %p193 = scmp.eq.s32.totalorder %s19, 0
    %p194 = por %p192, %p193
    %p195 = scmp.ne.s32.totalorder %s183, %s184
    %p196 = scmp.eq.s32.totalorder %s20, 7
    %p197 = por %p195, %p196
    %p199 = scmp.ne.s32.totalorder %s184, %s198
    %p200 = scmp.eq.s32.totalorder %s20, 0
    %p201 = por %p199, %p200
    %s203 = sadd.s32 %s202, 1
    %p206 = scmp.eq.s32.totalorder %s14, 7
    %p207 = scmp.ne.s32.totalorder %s202, %s204
    %p208 = scmp.eq.s32.totalorder %s14, 0
    %p209 = por %p207, %p208
    %p210 = scmp.ne.s32.totalorder %s202, %s204
    %p211 = scmp.eq.s32.totalorder %s19, 7
    %p212 = por %p210, %p211
    %p213 = scmp.ne.s32.totalorder %s204, %s205
    %p214 = scmp.eq.s32.totalorder %s19, 0
    %p215 = por %p213, %p214
    %p216 = scmp.ne.s32.totalorder %s204, %s205
    %p217 = scmp.eq.s32.totalorder %s20, 7
    %p218 = por %p216, %p217
    %p220 = scmp.ne.s32.totalorder %s205, %s219
    %p221 = scmp.eq.s32.totalorder %s20, 0
    %p222 = por %p220, %p221
    %p223 = scmp.le.s32.totalorder 1, %s14
    %p224 = scmp.lt.s32.totalorder %s14, 9
    %p225 = pnand %p223, %p224
    %p226 = pneg %p225
    // Predicated region
    $region9: #{gcn_forward.1} parent=5 // pred_check
      _
    $region10: #{gcn_forward.1} parent=5 // pred_check_branch
      %228 = sbr.rel (%p225) target = $region12
    $region11: #{gcn_forward.1} parent=5 // pred_region
      %s229 = ssub.s32 %s14, 1
      // Predicated region
      $region13: #{gcn_forward.1} parent=11 // pred_check
        %p230 = pneg %p47
      $region14: #{gcn_forward.1} parent=11 // pred_check_branch
        %232 = sbr.rel (%p230) target = $region16
      $region15: #{gcn_forward.1} parent=11 // pred_region
        _
      $region16: #{gcn_forward.1} parent=11 // pred_fallthru
        _
      // Predicated region
      $region17: #{gcn_forward.1} parent=11 // pred_check
        %p233 = pneg %p68
      $region18: #{gcn_forward.1} parent=11 // pred_check_branch
        %235 = sbr.rel (%p233) target = $region20
      $region19: #{gcn_forward.1} parent=11 // pred_region
        _
      $region20: #{gcn_forward.1} parent=11 // pred_fallthru
        _
      // Predicated region
      $region21: #{gcn_forward.1} parent=11 // pred_check
        %p236 = pneg %p89
      $region22: #{gcn_forward.1} parent=11 // pred_check_branch
        %238 = sbr.rel (%p236) target = $region24
      $region23: #{gcn_forward.1} parent=11 // pred_region
        _
      $region24: #{gcn_forward.1} parent=11 // pred_fallthru
        _
      // Predicated region
      $region25: #{gcn_forward.1} parent=11 // pred_check
        %p239 = pneg %p110
      $region26: #{gcn_forward.1} parent=11 // pred_check_branch
        %241 = sbr.rel (%p239) target = $region28
      $region27: #{gcn_forward.1} parent=11 // pred_region
        _
      $region28: #{gcn_forward.1} parent=11 // pred_fallthru
        _
      // Predicated region
      $region29: #{gcn_forward.1} parent=11 // pred_check
        %p242 = pneg %p131
      $region30: #{gcn_forward.1} parent=11 // pred_check_branch
        %244 = sbr.rel (%p242) target = $region32
      $region31: #{gcn_forward.1} parent=11 // pred_region
        _
      $region32: #{gcn_forward.1} parent=11 // pred_fallthru
        _
      // Predicated region
      $region33: #{gcn_forward.1} parent=11 // pred_check
        %p245 = pneg %p152
      $region34: #{gcn_forward.1} parent=11 // pred_check_branch
        %247 = sbr.rel (%p245) target = $region36
      $region35: #{gcn_forward.1} parent=11 // pred_region
        _
      $region36: #{gcn_forward.1} parent=11 // pred_fallthru
        _
      // Predicated region
      $region37: #{gcn_forward.1} parent=11 // pred_check
        %p248 = pneg %p173
      $region38: #{gcn_forward.1} parent=11 // pred_check_branch
        %250 = sbr.rel (%p248) target = $region40
      $region39: #{gcn_forward.1} parent=11 // pred_region
        _
      $region40: #{gcn_forward.1} parent=11 // pred_fallthru
        _
      // Predicated region
      $region41: #{gcn_forward.1} parent=11 // pred_check
        %p251 = pneg %p194
      $region42: #{gcn_forward.1} parent=11 // pred_check_branch
        %253 = sbr.rel (%p251) target = $region44
      $region43: #{gcn_forward.1} parent=11 // pred_region
        _
      $region44: #{gcn_forward.1} parent=11 // pred_fallthru
        _
    $region12: #{gcn_forward.1} parent=5 // pred_fallthru
      _
    %p254 = scmp.lt.s32.totalorder %s14, 8
    // Predicated region
    $region45: #{gcn_forward.1} parent=5 // pred_check
      %p255 = pneg %p254
    $region46: #{gcn_forward.1} parent=5 // pred_check_branch
      %257 = sbr.rel (%p255) target = $region48
    $region47: #{gcn_forward.1} parent=5 // pred_region
      _
    $region48: #{gcn_forward.1} parent=5 // pred_fallthru
      _
    %p258 = scmp.le.s32.totalorder 1, %s14
    %p259 = scmp.lt.s32.totalorder %s14, 9
    %p260 = pnand %p258, %p259
    %p261 = pneg %p260
    // Predicated region
    $region49: #{gcn_forward.1} parent=5 // pred_check
      _
    $region50: #{gcn_forward.1} parent=5 // pred_check_branch
      %263 = sbr.rel (%p260) target = $region52
    $region51: #{gcn_forward.1} parent=5 // pred_region
      %s264 = ssub.s32 %s14, 1
      %p265 = pneg %p47
      %p266 = pneg %p44
      %p267 = pneg %p68
      %p268 = pneg %p65
      %p269 = pneg %p89
      %p270 = pneg %p86
      %p271 = pneg %p110
      %p272 = pneg %p107
      %p273 = pneg %p131
      %p274 = pneg %p128
      %p275 = pneg %p152
      %p276 = pneg %p149
      %p277 = pneg %p173
      %p278 = pneg %p170
      %p279 = pneg %p194
      %p280 = pneg %p191
      %p281 = pneg %p215
      %p282 = pneg %p212
      %s284 = smul.u32 %s24, 64
      %p285 = scmp.eq.s32.totalorder %s23, 0
      // Predicated region
      $region53: #{gcn_forward.1} parent=51 // pred_check
        %p286 = pneg %p285
      $region54: #{gcn_forward.1} parent=51 // pred_check_branch
        %288 = sbr.rel (%p286) target = $region56
      $region55: #{gcn_forward.1} parent=51 // pred_region
        %s289 = sshra.s32 %s284, 3
        %s290 = sand.u32 %s284, 7
        %s291 = smul.u32 %s289, 2
        %s292 = smul.addr %s291, 4
        %s293 = scalar_lea.vmem %s1, %s292
        %v294 = vld [vmem:[%s293] sm:$0xff]
        %v295 = vld [vmem:[%s293 + $0x8] sm:$0xff]
        %v296 = vld [vmem:[%s293 + $0x10] sm:$0xff]
        %v297 = vld [vmem:[%s293 + $0x18] sm:$0xff]
        %v298 = vld [vmem:[%s293 + $0x20] sm:$0xff]
        %v299 = vld [vmem:[%s293 + $0x28] sm:$0xff]
        %v300 = vld [vmem:[%s293 + $0x30] sm:$0xff]
        %v301 = vld [vmem:[%s293 + $0x38] sm:$0xff]
        %v302 = vld [vmem:[%s2] sm:$0xf]
        %v303 = vld [vmem:[%s2 + $0x4] sm:$0xf]
        %v304 = vld [vmem:[%s2 + $0x8] sm:$0xf]
        %v305 = vld [vmem:[%s2 + $0xc] sm:$0xf]
        %v306 = vld [vmem:[%s2 + $0x10] sm:$0xf]
        %v307 = vld [vmem:[%s2 + $0x14] sm:$0xf]
        %v308 = vld [vmem:[%s2 + $0x18] sm:$0xf]
        %v309 = vld [vmem:[%s2 + $0x1c] sm:$0xf]
        %v310 = vld [vmem:[%s2 + $0x20] sm:$0xf]
        %v311 = vld [vmem:[%s2 + $0x24] sm:$0xf]
        %v312 = vld [vmem:[%s2 + $0x28] sm:$0xf]
        %v313 = vld [vmem:[%s2 + $0x2c] sm:$0xf]
        %v314 = vld [vmem:[%s2 + $0x30] sm:$0xf]
        %v315 = vld [vmem:[%s2 + $0x34] sm:$0xf]
        %v316 = vld [vmem:[%s2 + $0x38] sm:$0xf]
        %v317 = vld [vmem:[%s2 + $0x3c] sm:$0xf]
        %v318 = vld [vmem:[%s2 + $0x40] sm:$0xf]
        %v319 = vld [vmem:[%s2 + $0x44] sm:$0xf]
        %v320 = vld [vmem:[%s2 + $0x48] sm:$0xf]
        %v321 = vld [vmem:[%s2 + $0x4c] sm:$0xf]
        %v322 = vld [vmem:[%s2 + $0x50] sm:$0xf]
        %v323 = vld [vmem:[%s2 + $0x54] sm:$0xf]
        %v324 = vld [vmem:[%s2 + $0x58] sm:$0xf]
        %v325 = vld [vmem:[%s2 + $0x5c] sm:$0xf]
        %v326 = vld [vmem:[%s2 + $0x60] sm:$0xf]
        %v327 = vld [vmem:[%s2 + $0x64] sm:$0xf]
        %v328 = vld [vmem:[%s2 + $0x68] sm:$0xf]
        %v329 = vld [vmem:[%s2 + $0x6c] sm:$0xf]
        %v330 = vld [vmem:[%s2 + $0x70] sm:$0xf]
        %v331 = vld [vmem:[%s2 + $0x74] sm:$0xf]
        %v332 = vld [vmem:[%s2 + $0x78] sm:$0xf]
        %v333 = vld [vmem:[%s2 + $0x7c] sm:$0xf]
        %v342 = vunpack.c.l.b16 %v294
        %v343 = vunpack.c.h.b16 %v294
        %v344 = vunpack.c.l.b16 %v295
        %v345 = vunpack.c.h.b16 %v295
        %v346 = vunpack.c.l.b16 %v296
        %v347 = vunpack.c.h.b16 %v296
        %v348 = vunpack.c.l.b16 %v297
        %v349 = vunpack.c.h.b16 %v297
        %v350 = vunpack.c.l.b16 %v298
        %v351 = vunpack.c.h.b16 %v298
        %v352 = vunpack.c.l.b16 %v299
        %v353 = vunpack.c.h.b16 %v299
        %v354 = vunpack.c.l.b16 %v300
        %v355 = vunpack.c.h.b16 %v300
        %v356 = vunpack.c.l.b16 %v301
        %v357 = vunpack.c.h.b16 %v301
        %v358 = vpack.c.b16 %v344, %v342
        %v359 = vpack.c.b16 %v345, %v343
        %v360 = vpack.c.b16 %v348, %v346
        %v361 = vpack.c.b16 %v349, %v347
        %v362 = vpack.c.b16 %v352, %v350
        %v363 = vpack.c.b16 %v353, %v351
        %v364 = vpack.c.b16 %v356, %v354
        %v365 = vpack.c.b16 %v357, %v355
        %v406 = vunpack.c.l.b16 %v302
        %v407 = vunpack.c.l.b16 %v303
        %v408 = vunpack.c.l.b16 %v304
        %v409 = vunpack.c.l.b16 %v305
        %v410 = vunpack.c.l.b16 %v306
        %v411 = vunpack.c.l.b16 %v307
        %v412 = vunpack.c.l.b16 %v308
        %v413 = vunpack.c.l.b16 %v309
        %v414 = vunpack.c.l.b16 %v310
        %v415 = vunpack.c.l.b16 %v311
        %v416 = vunpack.c.l.b16 %v312
        %v417 = vunpack.c.l.b16 %v313
        %v418 = vunpack.c.l.b16 %v314
        %v419 = vunpack.c.l.b16 %v315
        %v420 = vunpack.c.l.b16 %v316
        %v421 = vunpack.c.l.b16 %v317
        %v422 = vunpack.c.l.b16 %v318
        %v423 = vunpack.c.l.b16 %v319
        %v424 = vunpack.c.l.b16 %v320
        %v425 = vunpack.c.l.b16 %v321
        %v426 = vunpack.c.l.b16 %v322
        %v427 = vunpack.c.l.b16 %v323
        %v428 = vunpack.c.l.b16 %v324
        %v429 = vunpack.c.l.b16 %v325
        %v430 = vunpack.c.l.b16 %v326
        %v431 = vunpack.c.l.b16 %v327
        %v432 = vunpack.c.l.b16 %v328
        %v433 = vunpack.c.l.b16 %v329
        %v434 = vunpack.c.l.b16 %v330
        %v435 = vunpack.c.l.b16 %v331
        %v436 = vunpack.c.l.b16 %v332
        %v437 = vunpack.c.l.b16 %v333
        %v438 = vpack.c.b16 %v407, %v406
        %v439 = vpack.c.b16 %v409, %v408
        %v440 = vpack.c.b16 %v411, %v410
        %v441 = vpack.c.b16 %v413, %v412
        %v442 = vpack.c.b16 %v415, %v414
        %v443 = vpack.c.b16 %v417, %v416
        %v444 = vpack.c.b16 %v419, %v418
        %v445 = vpack.c.b16 %v421, %v420
        %v446 = vpack.c.b16 %v423, %v422
        %v447 = vpack.c.b16 %v425, %v424
        %v448 = vpack.c.b16 %v427, %v426
        %v449 = vpack.c.b16 %v429, %v428
        %v450 = vpack.c.b16 %v431, %v430
        %v451 = vpack.c.b16 %v433, %v432
        %v452 = vpack.c.b16 %v435, %v434
        %v453 = vpack.c.b16 %v437, %v436
        %470 = vmatprep.subr.bf16.mxu0 0
        %471 = vmatpush1.bf16.msra.mxu0 %v445
        %472 = vmatprep.subr.bf16.mxu0 0
        %473 = vmatpush1.bf16.msra.mxu0 %v444
        %474 = vmatprep.subr.bf16.mxu0 0
        %475 = vmatpush1.bf16.msra.mxu0 %v443
        %476 = vmatprep.subr.bf16.mxu0 0
        %477 = vmatpush1.bf16.msra.mxu0 %v442
        %478 = vmatprep.subr.bf16.mxu0 0
        %479 = vmatpush1.bf16.msra.mxu0 %v441
        %480 = vmatprep.subr.bf16.mxu0 0
        %481 = vmatpush1.bf16.msra.mxu0 %v440
        %482 = vmatprep.subr.bf16.mxu0 0
        %483 = vmatpush1.bf16.msra.mxu0 %v439
        %484 = vmatprep.subr.bf16.mxu0 0
        %485 = vmatpush1.bf16.msra.mxu0 %v438
        %486 = vmatprep.subr.bf16.mxu0 0
        %487 = vmatpush2.bf16.msra.mxu0 %v453
        %488 = vmatprep.subr.bf16.mxu0 0
        %489 = vmatpush2.bf16.msra.mxu0 %v452
        %490 = vmatprep.subr.bf16.mxu0 0
        %491 = vmatpush2.bf16.msra.mxu0 %v451
        %492 = vmatprep.subr.bf16.mxu0 0
        %493 = vmatpush2.bf16.msra.mxu0 %v450
        %494 = vmatprep.subr.bf16.mxu0 0
        %495 = vmatpush2.bf16.msra.mxu0 %v449
        %496 = vmatprep.subr.bf16.mxu0 0
        %497 = vmatpush2.bf16.msra.mxu0 %v448
        %498 = vmatprep.subr.bf16.mxu0 0
        %499 = vmatpush2.bf16.msra.mxu0 %v447
        %500 = vmatprep.subr.bf16.mxu0 0
        %501 = vmatpush2.bf16.msra.mxu0 %v446
        %502 = vmatprep.mubr.bf16.mxu0 %v359
        %503 = vmatmul.mubr.bf16.gmra.mxu0 %v358
        %v504 = vpop.f32.mrf.mxu0
        %v505 = vadd.f32 0.0, %v504
        %v506 = vpop.f32.mrf.mxu0
        %v507 = vpop.f32.mrf.mxu0
        %v508 = vadd.f32 0.0, %v507
        %v509 = vpop.f32.mrf.mxu0
        %510 = vmatprep.mubr.bf16.mxu0 %v361
        %511 = vmatmul.mubr.bf16.gmra.mxu0 %v360
        %v512 = vpop.f32.mrf.mxu0
        %v513 = vadd.f32 0.0, %v512
        %v514 = vpop.f32.mrf.mxu0
        %v515 = vpop.f32.mrf.mxu0
        %v516 = vadd.f32 0.0, %v515
        %v517 = vpop.f32.mrf.mxu0
        %518 = vmatprep.mubr.bf16.mxu0 %v363
        %519 = vmatmul.mubr.bf16.gmra.mxu0 %v362
        %v520 = vpop.f32.mrf.mxu0
        %v521 = vadd.f32 0.0, %v520
        %v522 = vpop.f32.mrf.mxu0
        %v523 = vpop.f32.mrf.mxu0
        %v524 = vadd.f32 0.0, %v523
        %v525 = vpop.f32.mrf.mxu0
        %526 = vmatprep.mubr.bf16.mxu0 %v365
        %527 = vmatmul.mubr.bf16.gmra.mxu0 %v364
        %v528 = vpop.f32.mrf.mxu0
        %v529 = vadd.f32 0.0, %v528
        %v530 = vpop.f32.mrf.mxu0
        %v531 = vpop.f32.mrf.mxu0
        %v532 = vadd.f32 0.0, %v531
        %v533 = vpop.f32.mrf.mxu0
        %534 = vdwg.mxu0
        %v535 = vpack.c.bf16 %v508, %v505
        %v536 = vpack.c.bf16 %v516, %v513
        %v537 = vpack.c.bf16 %v524, %v521
        %v538 = vpack.c.bf16 %v532, %v529
        %v543 = vunpack.c.l.b16 %v535
        %v544 = vunpack.c.h.b16 %v535
        %v545 = vunpack.c.l.b16 %v536
        %v546 = vunpack.c.h.b16 %v536
        %v547 = vunpack.c.l.b16 %v537
        %v548 = vunpack.c.h.b16 %v537
        %v549 = vunpack.c.l.b16 %v538
        %v550 = vunpack.c.h.b16 %v538
        %v551 = vpack.c.b16 %v543, %v543
        %v552 = vpack.c.b16 %v544, %v544
        %v553 = vpack.c.b16 %v545, %v545
        %v554 = vpack.c.b16 %v546, %v546
        %v555 = vpack.c.b16 %v547, %v547
        %v556 = vpack.c.b16 %v548, %v548
        %v557 = vpack.c.b16 %v549, %v549
        %v558 = vpack.c.b16 %v550, %v550
        %s567 = smul.addr %s289, 4
        %s568 = scalar_lea.vmem [#allocation2], %s567
        %569 = vst [vmem:[%s568] sm:$0xf] %v551
        %570 = vst [vmem:[%s568 + $0x4] sm:$0xf] %v552
        %571 = vst [vmem:[%s568 + $0x8] sm:$0xf] %v553
        %572 = vst [vmem:[%s568 + $0xc] sm:$0xf] %v554
        %573 = vst [vmem:[%s568 + $0x10] sm:$0xf] %v555
        %574 = vst [vmem:[%s568 + $0x14] sm:$0xf] %v556
        %575 = vst [vmem:[%s568 + $0x18] sm:$0xf] %v557
        %576 = vst [vmem:[%s568 + $0x1c] sm:$0xf] %v558
      $region56: #{gcn_forward.1} parent=51 // pred_fallthru
        _
      %p577 = scmp.eq.s32.totalorder %s23, 1
      // Predicated region
      $region57: #{gcn_forward.1} parent=51 // pred_check
        %p578 = pneg %p577
      $region58: #{gcn_forward.1} parent=51 // pred_check_branch
        %580 = sbr.rel (%p578) target = $region60
      $region59: #{gcn_forward.1} parent=51 // pred_region
        %s581 = sshra.s32 %s284, 3
        %s582 = sand.u32 %s284, 7
        %s583 = smul.addr %s581, 4
        %s584 = scalar_lea.vmem %s0, %s583
        %v585 = vld [vmem:[%s584] sm:$0xf]
        %v586 = vld [vmem:[%s584 + $0x4] sm:$0xf]
        %v587 = vld [vmem:[%s584 + $0x8] sm:$0xf]
        %v588 = vld [vmem:[%s584 + $0xc] sm:$0xf]
        %v589 = vld [vmem:[%s584 + $0x10] sm:$0xf]
        %v590 = vld [vmem:[%s584 + $0x14] sm:$0xf]
        %v591 = vld [vmem:[%s584 + $0x18] sm:$0xf]
        %v592 = vld [vmem:[%s584 + $0x1c] sm:$0xf]
        %v593 = vld [vmem:[#allocation2] sm:$0xf]
        %v594 = vld [vmem:[#allocation2 + $0x4] sm:$0xf]
        %v595 = vld [vmem:[#allocation2 + $0x8] sm:$0xf]
        %v596 = vld [vmem:[#allocation2 + $0xc] sm:$0xf]
        %v597 = vld [vmem:[#allocation2 + $0x10] sm:$0xf]
        %v598 = vld [vmem:[#allocation2 + $0x14] sm:$0xf]
        %v599 = vld [vmem:[#allocation2 + $0x18] sm:$0xf]
        %v600 = vld [vmem:[#allocation2 + $0x1c] sm:$0xf]
        %v601 = vld [vmem:[#allocation2 + $0x20] sm:$0xf]
        %v602 = vld [vmem:[#allocation2 + $0x24] sm:$0xf]
        %v603 = vld [vmem:[#allocation2 + $0x28] sm:$0xf]
        %v604 = vld [vmem:[#allocation2 + $0x2c] sm:$0xf]
        %v605 = vld [vmem:[#allocation2 + $0x30] sm:$0xf]
        %v606 = vld [vmem:[#allocation2 + $0x34] sm:$0xf]
        %v607 = vld [vmem:[#allocation2 + $0x38] sm:$0xf]
        %v608 = vld [vmem:[#allocation2 + $0x3c] sm:$0xf]
        %v609 = vld [vmem:[%s3] sm:$0x1]
        %v611 = vlaneseq
        %v612 = vshrl.u32 %v611, 7
        %v613 = vsub.s32 0, %v612
        %v614 = vrot.slane %v609, %v613
        %v624 = vunpack.c.l.b16 %v585
        %v625 = vunpack.c.l.b16 %v586
        %v626 = vunpack.c.l.b16 %v587
        %v627 = vunpack.c.l.b16 %v588
        %v628 = vunpack.c.l.b16 %v589
        %v629 = vunpack.c.l.b16 %v590
        %v630 = vunpack.c.l.b16 %v591
        %v631 = vunpack.c.l.b16 %v592
        %v632 = vpack.c.b16 %v625, %v624
        %v633 = vpack.c.b16 %v627, %v626
        %v634 = vpack.c.b16 %v629, %v628
        %v635 = vpack.c.b16 %v631, %v630
        %v656 = vunpack.c.l.b16 %v593
        %v657 = vunpack.c.l.b16 %v594
        %v658 = vunpack.c.l.b16 %v595
        %v659 = vunpack.c.l.b16 %v596
        %v660 = vunpack.c.l.b16 %v597
        %v661 = vunpack.c.l.b16 %v598
        %v662 = vunpack.c.l.b16 %v599
        %v663 = vunpack.c.l.b16 %v600
        %v664 = vunpack.c.l.b16 %v601
        %v665 = vunpack.c.l.b16 %v602
        %v666 = vunpack.c.l.b16 %v603
        %v667 = vunpack.c.l.b16 %v604
        %v668 = vunpack.c.l.b16 %v605
        %v669 = vunpack.c.l.b16 %v606
        %v670 = vunpack.c.l.b16 %v607
        %v671 = vunpack.c.l.b16 %v608
        %v672 = vpack.c.b16 %v657, %v656
        %v673 = vpack.c.b16 %v659, %v658
        %v674 = vpack.c.b16 %v661, %v660
        %v675 = vpack.c.b16 %v663, %v662
        %v676 = vpack.c.b16 %v665, %v664
        %v677 = vpack.c.b16 %v667, %v666
        %v678 = vpack.c.b16 %v669, %v668
        %v679 = vpack.c.b16 %v671, %v670
        %688 = vmatprep.subr.bf16.mxu0 0
        %689 = vmatpush1.bf16.msra.mxu0 %v679
        %690 = vmatprep.subr.bf16.mxu0 0
        %691 = vmatpush1.bf16.msra.mxu0 %v678
        %692 = vmatprep.subr.bf16.mxu0 0
        %693 = vmatpush1.bf16.msra.mxu0 %v677
        %694 = vmatprep.subr.bf16.mxu0 0
        %695 = vmatpush1.bf16.msra.mxu0 %v676
        %696 = vmatprep.subr.bf16.mxu0 0
        %697 = vmatpush1.bf16.msra.mxu0 %v675
        %698 = vmatprep.subr.bf16.mxu0 0
        %699 = vmatpush1.bf16.msra.mxu0 %v674
        %700 = vmatprep.subr.bf16.mxu0 0
        %701 = vmatpush1.bf16.msra.mxu0 %v673
        %702 = vmatprep.subr.bf16.mxu0 0
        %703 = vmatpush1.bf16.msra.mxu0 %v672
        %704 = vmatprep.subr.bf16.mxu0 0
        %705 = vmatpush2.bf16.msra.mxu0 0
        %706 = vmatprep.subr.bf16.mxu0 0
        %707 = vmatpush2.bf16.msra.mxu0 0
        %708 = vmatprep.subr.bf16.mxu0 0
        %709 = vmatpush2.bf16.msra.mxu0 0
        %710 = vmatprep.subr.bf16.mxu0 0
        %711 = vmatpush2.bf16.msra.mxu0 0
        %712 = vmatprep.subr.bf16.mxu0 0
        %713 = vmatpush2.bf16.msra.mxu0 0
        %714 = vmatprep.subr.bf16.mxu0 0
        %715 = vmatpush2.bf16.msra.mxu0 0
        %716 = vmatprep.subr.bf16.mxu0 0
        %717 = vmatpush2.bf16.msra.mxu0 0
        %718 = vmatprep.subr.bf16.mxu0 0
        %719 = vmatpush2.bf16.msra.mxu0 0
        %720 = vmatprep.mubr.bf16.mxu0 0
        %721 = vmatmul.mubr.bf16.gmra.mxu0 %v632
        %v722 = vpop.f32.mrf.mxu0
        %v723 = vadd.f32 %v614, %v722
        %v724 = vpop.f32.mrf.mxu0
        %v725 = vpop.f32.mrf.mxu0
        %v726 = vadd.f32 %v614, %v725
        %v727 = vpop.f32.mrf.mxu0
        %728 = vmatprep.mubr.bf16.mxu0 0
        %729 = vmatmul.mubr.bf16.gmra.mxu0 %v633
        %v730 = vpop.f32.mrf.mxu0
        %v731 = vadd.f32 %v614, %v730
        %v732 = vpop.f32.mrf.mxu0
        %v733 = vpop.f32.mrf.mxu0
        %v734 = vadd.f32 %v614, %v733
        %v735 = vpop.f32.mrf.mxu0
        %736 = vmatprep.mubr.bf16.mxu0 0
        %737 = vmatmul.mubr.bf16.gmra.mxu0 %v634
        %v738 = vpop.f32.mrf.mxu0
        %v739 = vadd.f32 %v614, %v738
        %v740 = vpop.f32.mrf.mxu0
        %v741 = vpop.f32.mrf.mxu0
        %v742 = vadd.f32 %v614, %v741
        %v743 = vpop.f32.mrf.mxu0
        %744 = vmatprep.mubr.bf16.mxu0 0
        %745 = vmatmul.mubr.bf16.gmra.mxu0 %v635
        %v746 = vpop.f32.mrf.mxu0
        %v747 = vadd.f32 %v614, %v746
        %v748 = vpop.f32.mrf.mxu0
        %v749 = vpop.f32.mrf.mxu0
        %v750 = vadd.f32 %v614, %v749
        %v751 = vpop.f32.mrf.mxu0
        %752 = vdwg.mxu0
        %v753 = vmax.f32 %v723, 0.0
        %v754 = vmax.f32 %v726, 0.0
        %v755 = vmax.f32 %v731, 0.0
        %v756 = vmax.f32 %v734, 0.0
        %v757 = vmax.f32 %v739, 0.0
        %v758 = vmax.f32 %v742, 0.0
        %v759 = vmax.f32 %v747, 0.0
        %v760 = vmax.f32 %v750, 0.0
        %v761 = vpack.c.bf16 %v754, %v753
        %v762 = vpack.c.bf16 %v756, %v755
        %v763 = vpack.c.bf16 %v758, %v757
        %v764 = vpack.c.bf16 %v760, %v759
        %v765 = vld [vmem:[%s4] sm:$0xf]
        %v766 = vld [vmem:[%s4 + $0x4] sm:$0xf]
        %v767 = vld [vmem:[%s4 + $0x8] sm:$0xf]
        %v768 = vld [vmem:[%s4 + $0xc] sm:$0xf]
        %v769 = vld [vmem:[%s4 + $0x10] sm:$0xf]
        %v770 = vld [vmem:[%s4 + $0x14] sm:$0xf]
        %v771 = vld [vmem:[%s4 + $0x18] sm:$0xf]
        %v772 = vld [vmem:[%s4 + $0x1c] sm:$0xf]
        %v773 = vld [vmem:[%s4 + $0x20] sm:$0xf]
        %v774 = vld [vmem:[%s4 + $0x24] sm:$0xf]
        %v775 = vld [vmem:[%s4 + $0x28] sm:$0xf]
        %v776 = vld [vmem:[%s4 + $0x2c] sm:$0xf]
        %v777 = vld [vmem:[%s4 + $0x30] sm:$0xf]
        %v778 = vld [vmem:[%s4 + $0x34] sm:$0xf]
        %v779 = vld [vmem:[%s4 + $0x38] sm:$0xf]
        %v780 = vld [vmem:[%s4 + $0x3c] sm:$0xf]
        %v797 = vunpack.c.l.b16 %v765
        %v798 = vunpack.c.l.b16 %v766
        %v799 = vunpack.c.l.b16 %v767
        %v800 = vunpack.c.l.b16 %v768
        %v801 = vunpack.c.l.b16 %v769
        %v802 = vunpack.c.l.b16 %v770
        %v803 = vunpack.c.l.b16 %v771
        %v804 = vunpack.c.l.b16 %v772
        %v805 = vunpack.c.l.b16 %v773
        %v806 = vunpack.c.l.b16 %v774
        %v807 = vunpack.c.l.b16 %v775
        %v808 = vunpack.c.l.b16 %v776
        %v809 = vunpack.c.l.b16 %v777
        %v810 = vunpack.c.l.b16 %v778
        %v811 = vunpack.c.l.b16 %v779
        %v812 = vunpack.c.l.b16 %v780
        %v813 = vpack.c.b16 %v798, %v797
        %v814 = vpack.c.b16 %v800, %v799
        %v815 = vpack.c.b16 %v802, %v801
        %v816 = vpack.c.b16 %v804, %v803
        %v817 = vpack.c.b16 %v806, %v805
        %v818 = vpack.c.b16 %v808, %v807
        %v819 = vpack.c.b16 %v810, %v809
        %v820 = vpack.c.b16 %v812, %v811
        %829 = vmatprep.subr.bf16.mxu0 0
        %830 = vmatpush1.bf16.msra.mxu0 %v820
        %831 = vmatprep.subr.bf16.mxu0 0
        %832 = vmatpush1.bf16.msra.mxu0 %v819
        %833 = vmatprep.subr.bf16.mxu0 0
        %834 = vmatpush1.bf16.msra.mxu0 %v818
        %835 = vmatprep.subr.bf16.mxu0 0
        %836 = vmatpush1.bf16.msra.mxu0 %v817
        %837 = vmatprep.subr.bf16.mxu0 0
        %838 = vmatpush1.bf16.msra.mxu0 %v816
        %839 = vmatprep.subr.bf16.mxu0 0
        %840 = vmatpush1.bf16.msra.mxu0 %v815
        %841 = vmatprep.subr.bf16.mxu0 0
        %842 = vmatpush1.bf16.msra.mxu0 %v814
        %843 = vmatprep.subr.bf16.mxu0 0
        %844 = vmatpush1.bf16.msra.mxu0 %v813
        %845 = vmatprep.subr.bf16.mxu0 0
        %846 = vmatpush2.bf16.msra.mxu0 0
        %847 = vmatprep.subr.bf16.mxu0 0
        %848 = vmatpush2.bf16.msra.mxu0 0
        %849 = vmatprep.subr.bf16.mxu0 0
        %850 = vmatpush2.bf16.msra.mxu0 0
        %851 = vmatprep.subr.bf16.mxu0 0
        %852 = vmatpush2.bf16.msra.mxu0 0
        %853 = vmatprep.subr.bf16.mxu0 0
        %854 = vmatpush2.bf16.msra.mxu0 0
        %855 = vmatprep.subr.bf16.mxu0 0
        %856 = vmatpush2.bf16.msra.mxu0 0
        %857 = vmatprep.subr.bf16.mxu0 0
        %858 = vmatpush2.bf16.msra.mxu0 0
        %859 = vmatprep.subr.bf16.mxu0 0
        %860 = vmatpush2.bf16.msra.mxu0 0
        %861 = vmatprep.mubr.bf16.mxu0 0
        %862 = vmatmul.mubr.bf16.gmra.mxu0 %v761
        %v863 = vpop.f32.mrf.mxu0
        %v864 = vadd.f32 0.0, %v863
        %v865 = vpop.f32.mrf.mxu0
        %v866 = vpop.f32.mrf.mxu0
        %v867 = vadd.f32 0.0, %v866
        %v868 = vpop.f32.mrf.mxu0
        %869 = vmatprep.mubr.bf16.mxu0 0
        %870 = vmatmul.mubr.bf16.gmra.mxu0 %v762
        %v871 = vpop.f32.mrf.mxu0
        %v872 = vadd.f32 0.0, %v871
        %v873 = vpop.f32.mrf.mxu0
        %v874 = vpop.f32.mrf.mxu0
        %v875 = vadd.f32 0.0, %v874
        %v876 = vpop.f32.mrf.mxu0
        %877 = vmatprep.mubr.bf16.mxu0 0
        %878 = vmatmul.mubr.bf16.gmra.mxu0 %v763
        %v879 = vpop.f32.mrf.mxu0
        %v880 = vadd.f32 0.0, %v879
        %v881 = vpop.f32.mrf.mxu0
        %v882 = vpop.f32.mrf.mxu0
        %v883 = vadd.f32 0.0, %v882
        %v884 = vpop.f32.mrf.mxu0
        %885 = vmatprep.mubr.bf16.mxu0 0
        %886 = vmatmul.mubr.bf16.gmra.mxu0 %v764
        %v887 = vpop.f32.mrf.mxu0
        %v888 = vadd.f32 0.0, %v887
        %v889 = vpop.f32.mrf.mxu0
        %v890 = vpop.f32.mrf.mxu0
        %v891 = vadd.f32 0.0, %v890
        %v892 = vpop.f32.mrf.mxu0
        %893 = vdwg.mxu0
        %v894 = vpack.c.bf16 %v867, %v864
        %v895 = vpack.c.bf16 %v875, %v872
        %v896 = vpack.c.bf16 %v883, %v880
        %v897 = vpack.c.bf16 %v891, %v888
        %v902 = vunpack.c.l.b16 %v894
        %v903 = vunpack.c.h.b16 %v894
        %v904 = vunpack.c.l.b16 %v895
        %v905 = vunpack.c.h.b16 %v895
        %v906 = vunpack.c.l.b16 %v896
        %v907 = vunpack.c.h.b16 %v896
        %v908 = vunpack.c.l.b16 %v897
        %v909 = vunpack.c.h.b16 %v897
        %v910 = vpack.c.b16 %v902, %v902
        %v911 = vpack.c.b16 %v903, %v903
        %v912 = vpack.c.b16 %v904, %v904
        %v913 = vpack.c.b16 %v905, %v905
        %v914 = vpack.c.b16 %v906, %v906
        %v915 = vpack.c.b16 %v907, %v907
        %v916 = vpack.c.b16 %v908, %v908
        %v917 = vpack.c.b16 %v909, %v909
        %s926 = smul.addr %s581, 4
        %s927 = scalar_lea.vmem [#allocation3], %s926
        %928 = vst [vmem:[%s927] sm:$0xf] %v910
        %929 = vst [vmem:[%s927 + $0x4] sm:$0xf] %v911
        %930 = vst [vmem:[%s927 + $0x8] sm:$0xf] %v912
        %931 = vst [vmem:[%s927 + $0xc] sm:$0xf] %v913
        %932 = vst [vmem:[%s927 + $0x10] sm:$0xf] %v914
        %933 = vst [vmem:[%s927 + $0x14] sm:$0xf] %v915
        %934 = vst [vmem:[%s927 + $0x18] sm:$0xf] %v916
        %935 = vst [vmem:[%s927 + $0x1c] sm:$0xf] %v917
      $region60: #{gcn_forward.1} parent=51 // pred_fallthru
        _
      %p936 = scmp.eq.s32.totalorder %s23, 2
      // Predicated region
      $region61: #{gcn_forward.1} parent=51 // pred_check
        %p937 = pneg %p936
      $region62: #{gcn_forward.1} parent=51 // pred_check_branch
        %939 = sbr.rel (%p937) target = $region64
      $region63: #{gcn_forward.1} parent=51 // pred_region
        %s940 = sshra.s32 %s284, 3
        %s941 = sand.u32 %s284, 7
        %s942 = smul.addr %s940, 4
        %s943 = scalar_lea.vmem %s0, %s942
        %v944 = vld [vmem:[%s943] sm:$0xf]
        %v945 = vld [vmem:[%s943 + $0x4] sm:$0xf]
        %v946 = vld [vmem:[%s943 + $0x8] sm:$0xf]
        %v947 = vld [vmem:[%s943 + $0xc] sm:$0xf]
        %v948 = vld [vmem:[%s943 + $0x10] sm:$0xf]
        %v949 = vld [vmem:[%s943 + $0x14] sm:$0xf]
        %v950 = vld [vmem:[%s943 + $0x18] sm:$0xf]
        %v951 = vld [vmem:[%s943 + $0x1c] sm:$0xf]
        %v952 = vld [vmem:[#allocation3] sm:$0xf]
        %v953 = vld [vmem:[#allocation3 + $0x4] sm:$0xf]
        %v954 = vld [vmem:[#allocation3 + $0x8] sm:$0xf]
        %v955 = vld [vmem:[#allocation3 + $0xc] sm:$0xf]
        %v956 = vld [vmem:[#allocation3 + $0x10] sm:$0xf]
        %v957 = vld [vmem:[#allocation3 + $0x14] sm:$0xf]
        %v958 = vld [vmem:[#allocation3 + $0x18] sm:$0xf]
        %v959 = vld [vmem:[#allocation3 + $0x1c] sm:$0xf]
        %v960 = vld [vmem:[#allocation3 + $0x20] sm:$0xf]
        %v961 = vld [vmem:[#allocation3 + $0x24] sm:$0xf]
        %v962 = vld [vmem:[#allocation3 + $0x28] sm:$0xf]
        %v963 = vld [vmem:[#allocation3 + $0x2c] sm:$0xf]
        %v964 = vld [vmem:[#allocation3 + $0x30] sm:$0xf]
        %v965 = vld [vmem:[#allocation3 + $0x34] sm:$0xf]
        %v966 = vld [vmem:[#allocation3 + $0x38] sm:$0xf]
        %v967 = vld [vmem:[#allocation3 + $0x3c] sm:$0xf]
        %v968 = vld [vmem:[%s5] sm:$0x1]
        %v970 = vlaneseq
        %v971 = vshrl.u32 %v970, 7
        %v972 = vsub.s32 0, %v971
        %v973 = vrot.slane %v968, %v972
        %v983 = vunpack.c.l.b16 %v944
        %v984 = vunpack.c.l.b16 %v945
        %v985 = vunpack.c.l.b16 %v946
        %v986 = vunpack.c.l.b16 %v947
        %v987 = vunpack.c.l.b16 %v948
        %v988 = vunpack.c.l.b16 %v949
        %v989 = vunpack.c.l.b16 %v950
        %v990 = vunpack.c.l.b16 %v951
        %v991 = vpack.c.b16 %v984, %v983
        %v992 = vpack.c.b16 %v986, %v985
        %v993 = vpack.c.b16 %v988, %v987
        %v994 = vpack.c.b16 %v990, %v989
        %v1015 = vunpack.c.l.b16 %v952
        %v1016 = vunpack.c.l.b16 %v953
        %v1017 = vunpack.c.l.b16 %v954
        %v1018 = vunpack.c.l.b16 %v955
        %v1019 = vunpack.c.l.b16 %v956
        %v1020 = vunpack.c.l.b16 %v957
        %v1021 = vunpack.c.l.b16 %v958
        %v1022 = vunpack.c.l.b16 %v959
        %v1023 = vunpack.c.l.b16 %v960
        %v1024 = vunpack.c.l.b16 %v961
        %v1025 = vunpack.c.l.b16 %v962
        %v1026 = vunpack.c.l.b16 %v963
        %v1027 = vunpack.c.l.b16 %v964
        %v1028 = vunpack.c.l.b16 %v965
        %v1029 = vunpack.c.l.b16 %v966
        %v1030 = vunpack.c.l.b16 %v967
        %v1031 = vpack.c.b16 %v1016, %v1015
        %v1032 = vpack.c.b16 %v1018, %v1017
        %v1033 = vpack.c.b16 %v1020, %v1019
        %v1034 = vpack.c.b16 %v1022, %v1021
        %v1035 = vpack.c.b16 %v1024, %v1023
        %v1036 = vpack.c.b16 %v1026, %v1025
        %v1037 = vpack.c.b16 %v1028, %v1027
        %v1038 = vpack.c.b16 %v1030, %v1029
        %1047 = vmatprep.subr.bf16.mxu0 0
        %1048 = vmatpush1.bf16.msra.mxu0 %v1038
        %1049 = vmatprep.subr.bf16.mxu0 0
        %1050 = vmatpush1.bf16.msra.mxu0 %v1037
        %1051 = vmatprep.subr.bf16.mxu0 0
        %1052 = vmatpush1.bf16.msra.mxu0 %v1036
        %1053 = vmatprep.subr.bf16.mxu0 0
        %1054 = vmatpush1.bf16.msra.mxu0 %v1035
        %1055 = vmatprep.subr.bf16.mxu0 0
        %1056 = vmatpush1.bf16.msra.mxu0 %v1034
        %1057 = vmatprep.subr.bf16.mxu0 0
        %1058 = vmatpush1.bf16.msra.mxu0 %v1033
        %1059 = vmatprep.subr.bf16.mxu0 0
        %1060 = vmatpush1.bf16.msra.mxu0 %v1032
        %1061 = vmatprep.subr.bf16.mxu0 0
        %1062 = vmatpush1.bf16.msra.mxu0 %v1031
        %1063 = vmatprep.subr.bf16.mxu0 0
        %1064 = vmatpush2.bf16.msra.mxu0 0
        %1065 = vmatprep.subr.bf16.mxu0 0
        %1066 = vmatpush2.bf16.msra.mxu0 0
        %1067 = vmatprep.subr.bf16.mxu0 0
        %1068 = vmatpush2.bf16.msra.mxu0 0
        %1069 = vmatprep.subr.bf16.mxu0 0
        %1070 = vmatpush2.bf16.msra.mxu0 0
        %1071 = vmatprep.subr.bf16.mxu0 0
        %1072 = vmatpush2.bf16.msra.mxu0 0
        %1073 = vmatprep.subr.bf16.mxu0 0
        %1074 = vmatpush2.bf16.msra.mxu0 0
        %1075 = vmatprep.subr.bf16.mxu0 0
        %1076 = vmatpush2.bf16.msra.mxu0 0
        %1077 = vmatprep.subr.bf16.mxu0 0
        %1078 = vmatpush2.bf16.msra.mxu0 0
        %1079 = vmatprep.mubr.bf16.mxu0 0
        %1080 = vmatmul.mubr.bf16.gmra.mxu0 %v991
        %v1081 = vpop.f32.mrf.mxu0
        %v1082 = vadd.f32 %v973, %v1081
        %v1083 = vpop.f32.mrf.mxu0
        %v1084 = vpop.f32.mrf.mxu0
        %v1085 = vadd.f32 %v973, %v1084
        %v1086 = vpop.f32.mrf.mxu0
        %1087 = vmatprep.mubr.bf16.mxu0 0
        %1088 = vmatmul.mubr.bf16.gmra.mxu0 %v992
        %v1089 = vpop.f32.mrf.mxu0
        %v1090 = vadd.f32 %v973, %v1089
        %v1091 = vpop.f32.mrf.mxu0
        %v1092 = vpop.f32.mrf.mxu0
        %v1093 = vadd.f32 %v973, %v1092
        %v1094 = vpop.f32.mrf.mxu0
        %1095 = vmatprep.mubr.bf16.mxu0 0
        %1096 = vmatmul.mubr.bf16.gmra.mxu0 %v993
        %v1097 = vpop.f32.mrf.mxu0
        %v1098 = vadd.f32 %v973, %v1097
        %v1099 = vpop.f32.mrf.mxu0
        %v1100 = vpop.f32.mrf.mxu0
        %v1101 = vadd.f32 %v973, %v1100
        %v1102 = vpop.f32.mrf.mxu0
        %1103 = vmatprep.mubr.bf16.mxu0 0
        %1104 = vmatmul.mubr.bf16.gmra.mxu0 %v994
        %v1105 = vpop.f32.mrf.mxu0
        %v1106 = vadd.f32 %v973, %v1105
        %v1107 = vpop.f32.mrf.mxu0
        %v1108 = vpop.f32.mrf.mxu0
        %v1109 = vadd.f32 %v973, %v1108
        %v1110 = vpop.f32.mrf.mxu0
        %1111 = vdwg.mxu0
        %v1112 = vmax.f32 %v1082, 0.0
        %v1113 = vmax.f32 %v1085, 0.0
        %v1114 = vmax.f32 %v1090, 0.0
        %v1115 = vmax.f32 %v1093, 0.0
        %v1116 = vmax.f32 %v1098, 0.0
        %v1117 = vmax.f32 %v1101, 0.0
        %v1118 = vmax.f32 %v1106, 0.0
        %v1119 = vmax.f32 %v1109, 0.0
        %v1120 = vpack.c.bf16 %v1113, %v1112
        %v1121 = vpack.c.bf16 %v1115, %v1114
        %v1122 = vpack.c.bf16 %v1117, %v1116
        %v1123 = vpack.c.bf16 %v1119, %v1118
        %v1124 = vld [vmem:[%s6] sm:$0xf]
        %v1125 = vld [vmem:[%s6 + $0x4] sm:$0xf]
        %v1126 = vld [vmem:[%s6 + $0x8] sm:$0xf]
        %v1127 = vld [vmem:[%s6 + $0xc] sm:$0xf]
        %v1128 = vld [vmem:[%s6 + $0x10] sm:$0xf]
        %v1129 = vld [vmem:[%s6 + $0x14] sm:$0xf]
        %v1130 = vld [vmem:[%s6 + $0x18] sm:$0xf]
        %v1131 = vld [vmem:[%s6 + $0x1c] sm:$0xf]
        %v1132 = vld [vmem:[%s6 + $0x20] sm:$0xf]
        %v1133 = vld [vmem:[%s6 + $0x24] sm:$0xf]
        %v1134 = vld [vmem:[%s6 + $0x28] sm:$0xf]
        %v1135 = vld [vmem:[%s6 + $0x2c] sm:$0xf]
        %v1136 = vld [vmem:[%s6 + $0x30] sm:$0xf]
        %v1137 = vld [vmem:[%s6 + $0x34] sm:$0xf]
        %v1138 = vld [vmem:[%s6 + $0x38] sm:$0xf]
        %v1139 = vld [vmem:[%s6 + $0x3c] sm:$0xf]
        %v1156 = vunpack.c.l.b16 %v1124
        %v1157 = vunpack.c.l.b16 %v1125
        %v1158 = vunpack.c.l.b16 %v1126
        %v1159 = vunpack.c.l.b16 %v1127
        %v1160 = vunpack.c.l.b16 %v1128
        %v1161 = vunpack.c.l.b16 %v1129
        %v1162 = vunpack.c.l.b16 %v1130
        %v1163 = vunpack.c.l.b16 %v1131
        %v1164 = vunpack.c.l.b16 %v1132
        %v1165 = vunpack.c.l.b16 %v1133
        %v1166 = vunpack.c.l.b16 %v1134
        %v1167 = vunpack.c.l.b16 %v1135
        %v1168 = vunpack.c.l.b16 %v1136
        %v1169 = vunpack.c.l.b16 %v1137
        %v1170 = vunpack.c.l.b16 %v1138
        %v1171 = vunpack.c.l.b16 %v1139
        %v1172 = vpack.c.b16 %v1157, %v1156
        %v1173 = vpack.c.b16 %v1159, %v1158
        %v1174 = vpack.c.b16 %v1161, %v1160
        %v1175 = vpack.c.b16 %v1163, %v1162
        %v1176 = vpack.c.b16 %v1165, %v1164
        %v1177 = vpack.c.b16 %v1167, %v1166
        %v1178 = vpack.c.b16 %v1169, %v1168
        %v1179 = vpack.c.b16 %v1171, %v1170
        %1188 = vmatprep.subr.bf16.mxu0 0
        %1189 = vmatpush1.bf16.msra.mxu0 %v1179
        %1190 = vmatprep.subr.bf16.mxu0 0
        %1191 = vmatpush1.bf16.msra.mxu0 %v1178
        %1192 = vmatprep.subr.bf16.mxu0 0
        %1193 = vmatpush1.bf16.msra.mxu0 %v1177
        %1194 = vmatprep.subr.bf16.mxu0 0
        %1195 = vmatpush1.bf16.msra.mxu0 %v1176
        %1196 = vmatprep.subr.bf16.mxu0 0
        %1197 = vmatpush1.bf16.msra.mxu0 %v1175
        %1198 = vmatprep.subr.bf16.mxu0 0
        %1199 = vmatpush1.bf16.msra.mxu0 %v1174
        %1200 = vmatprep.subr.bf16.mxu0 0
        %1201 = vmatpush1.bf16.msra.mxu0 %v1173
        %1202 = vmatprep.subr.bf16.mxu0 0
        %1203 = vmatpush1.bf16.msra.mxu0 %v1172
        %1204 = vmatprep.subr.bf16.mxu0 0
        %1205 = vmatpush2.bf16.msra.mxu0 0
        %1206 = vmatprep.subr.bf16.mxu0 0
        %1207 = vmatpush2.bf16.msra.mxu0 0
        %1208 = vmatprep.subr.bf16.mxu0 0
        %1209 = vmatpush2.bf16.msra.mxu0 0
        %1210 = vmatprep.subr.bf16.mxu0 0
        %1211 = vmatpush2.bf16.msra.mxu0 0
        %1212 = vmatprep.subr.bf16.mxu0 0
        %1213 = vmatpush2.bf16.msra.mxu0 0
        %1214 = vmatprep.subr.bf16.mxu0 0
        %1215 = vmatpush2.bf16.msra.mxu0 0
        %1216 = vmatprep.subr.bf16.mxu0 0
        %1217 = vmatpush2.bf16.msra.mxu0 0
        %1218 = vmatprep.subr.bf16.mxu0 0
        %1219 = vmatpush2.bf16.msra.mxu0 0
        %1220 = vmatprep.mubr.bf16.mxu0 0
        %1221 = vmatmul.mubr.bf16.gmra.mxu0 %v1120
        %v1222 = vpop.f32.mrf.mxu0
        %v1223 = vadd.f32 0.0, %v1222
        %v1224 = vpop.f32.mrf.mxu0
        %v1225 = vpop.f32.mrf.mxu0
        %v1226 = vadd.f32 0.0, %v1225
        %v1227 = vpop.f32.mrf.mxu0
        %1228 = vmatprep.mubr.bf16.mxu0 0
        %1229 = vmatmul.mubr.bf16.gmra.mxu0 %v1121
        %v1230 = vpop.f32.mrf.mxu0
        %v1231 = vadd.f32 0.0, %v1230
        %v1232 = vpop.f32.mrf.mxu0
        %v1233 = vpop.f32.mrf.mxu0
        %v1234 = vadd.f32 0.0, %v1233
        %v1235 = vpop.f32.mrf.mxu0
        %1236 = vmatprep.mubr.bf16.mxu0 0
        %1237 = vmatmul.mubr.bf16.gmra.mxu0 %v1122
        %v1238 = vpop.f32.mrf.mxu0
        %v1239 = vadd.f32 0.0, %v1238
        %v1240 = vpop.f32.mrf.mxu0
        %v1241 = vpop.f32.mrf.mxu0
        %v1242 = vadd.f32 0.0, %v1241
        %v1243 = vpop.f32.mrf.mxu0
        %1244 = vmatprep.mubr.bf16.mxu0 0
        %1245 = vmatmul.mubr.bf16.gmra.mxu0 %v1123
        %v1246 = vpop.f32.mrf.mxu0
        %v1247 = vadd.f32 0.0, %v1246
        %v1248 = vpop.f32.mrf.mxu0
        %v1249 = vpop.f32.mrf.mxu0
        %v1250 = vadd.f32 0.0, %v1249
        %v1251 = vpop.f32.mrf.mxu0
        %1252 = vdwg.mxu0
        %v1253 = vpack.c.bf16 %v1226, %v1223
        %v1254 = vpack.c.bf16 %v1234, %v1231
        %v1255 = vpack.c.bf16 %v1242, %v1239
        %v1256 = vpack.c.bf16 %v1250, %v1247
        %v1261 = vunpack.c.l.b16 %v1253
        %v1262 = vunpack.c.h.b16 %v1253
        %v1263 = vunpack.c.l.b16 %v1254
        %v1264 = vunpack.c.h.b16 %v1254
        %v1265 = vunpack.c.l.b16 %v1255
        %v1266 = vunpack.c.h.b16 %v1255
        %v1267 = vunpack.c.l.b16 %v1256
        %v1268 = vunpack.c.h.b16 %v1256
        %v1269 = vpack.c.b16 %v1261, %v1261
        %v1270 = vpack.c.b16 %v1262, %v1262
        %v1271 = vpack.c.b16 %v1263, %v1263
        %v1272 = vpack.c.b16 %v1264, %v1264
        %v1273 = vpack.c.b16 %v1265, %v1265
        %v1274 = vpack.c.b16 %v1266, %v1266
        %v1275 = vpack.c.b16 %v1267, %v1267
        %v1276 = vpack.c.b16 %v1268, %v1268
        %s1285 = smul.addr %s940, 4
        %s1286 = scalar_lea.vmem [#allocation4], %s1285
        %1287 = vst [vmem:[%s1286] sm:$0xf] %v1269
        %1288 = vst [vmem:[%s1286 + $0x4] sm:$0xf] %v1270
        %1289 = vst [vmem:[%s1286 + $0x8] sm:$0xf] %v1271
        %1290 = vst [vmem:[%s1286 + $0xc] sm:$0xf] %v1272
        %1291 = vst [vmem:[%s1286 + $0x10] sm:$0xf] %v1273
        %1292 = vst [vmem:[%s1286 + $0x14] sm:$0xf] %v1274
        %1293 = vst [vmem:[%s1286 + $0x18] sm:$0xf] %v1275
        %1294 = vst [vmem:[%s1286 + $0x1c] sm:$0xf] %v1276
      $region64: #{gcn_forward.1} parent=51 // pred_fallthru
        _
      %p1295 = scmp.eq.s32.totalorder %s23, 3
      // Predicated region
      $region65: #{gcn_forward.1} parent=51 // pred_check
        %p1296 = pneg %p1295
      $region66: #{gcn_forward.1} parent=51 // pred_check_branch
        %1298 = sbr.rel (%p1296) target = $region68
      $region67: #{gcn_forward.1} parent=51 // pred_region
        %s1299 = sshra.s32 %s284, 3
        %s1300 = sand.u32 %s284, 7
        %s1301 = smul.addr %s1299, 4
        %s1302 = scalar_lea.vmem %s0, %s1301
        %v1303 = vld [vmem:[%s1302] sm:$0xf]
        %v1304 = vld [vmem:[%s1302 + $0x4] sm:$0xf]
        %v1305 = vld [vmem:[%s1302 + $0x8] sm:$0xf]
        %v1306 = vld [vmem:[%s1302 + $0xc] sm:$0xf]
        %v1307 = vld [vmem:[%s1302 + $0x10] sm:$0xf]
        %v1308 = vld [vmem:[%s1302 + $0x14] sm:$0xf]
        %v1309 = vld [vmem:[%s1302 + $0x18] sm:$0xf]
        %v1310 = vld [vmem:[%s1302 + $0x1c] sm:$0xf]
        %v1311 = vld [vmem:[#allocation4] sm:$0xf]
        %v1312 = vld [vmem:[#allocation4 + $0x4] sm:$0xf]
        %v1313 = vld [vmem:[#allocation4 + $0x8] sm:$0xf]
        %v1314 = vld [vmem:[#allocation4 + $0xc] sm:$0xf]
        %v1315 = vld [vmem:[#allocation4 + $0x10] sm:$0xf]
        %v1316 = vld [vmem:[#allocation4 + $0x14] sm:$0xf]
        %v1317 = vld [vmem:[#allocation4 + $0x18] sm:$0xf]
        %v1318 = vld [vmem:[#allocation4 + $0x1c] sm:$0xf]
        %v1319 = vld [vmem:[#allocation4 + $0x20] sm:$0xf]
        %v1320 = vld [vmem:[#allocation4 + $0x24] sm:$0xf]
        %v1321 = vld [vmem:[#allocation4 + $0x28] sm:$0xf]
        %v1322 = vld [vmem:[#allocation4 + $0x2c] sm:$0xf]
        %v1323 = vld [vmem:[#allocation4 + $0x30] sm:$0xf]
        %v1324 = vld [vmem:[#allocation4 + $0x34] sm:$0xf]
        %v1325 = vld [vmem:[#allocation4 + $0x38] sm:$0xf]
        %v1326 = vld [vmem:[#allocation4 + $0x3c] sm:$0xf]
        %v1327 = vld [vmem:[%s7] sm:$0x1]
        %v1329 = vlaneseq
        %v1330 = vshrl.u32 %v1329, 7
        %v1331 = vsub.s32 0, %v1330
        %v1332 = vrot.slane %v1327, %v1331
        %v1342 = vunpack.c.l.b16 %v1303
        %v1343 = vunpack.c.l.b16 %v1304
        %v1344 = vunpack.c.l.b16 %v1305
        %v1345 = vunpack.c.l.b16 %v1306
        %v1346 = vunpack.c.l.b16 %v1307
        %v1347 = vunpack.c.l.b16 %v1308
        %v1348 = vunpack.c.l.b16 %v1309
        %v1349 = vunpack.c.l.b16 %v1310
        %v1350 = vpack.c.b16 %v1343, %v1342
        %v1351 = vpack.c.b16 %v1345, %v1344
        %v1352 = vpack.c.b16 %v1347, %v1346
        %v1353 = vpack.c.b16 %v1349, %v1348
        %v1374 = vunpack.c.l.b16 %v1311
        %v1375 = vunpack.c.l.b16 %v1312
        %v1376 = vunpack.c.l.b16 %v1313
        %v1377 = vunpack.c.l.b16 %v1314
        %v1378 = vunpack.c.l.b16 %v1315
        %v1379 = vunpack.c.l.b16 %v1316
        %v1380 = vunpack.c.l.b16 %v1317
        %v1381 = vunpack.c.l.b16 %v1318
        %v1382 = vunpack.c.l.b16 %v1319
        %v1383 = vunpack.c.l.b16 %v1320
        %v1384 = vunpack.c.l.b16 %v1321
        %v1385 = vunpack.c.l.b16 %v1322
        %v1386 = vunpack.c.l.b16 %v1323
        %v1387 = vunpack.c.l.b16 %v1324
        %v1388 = vunpack.c.l.b16 %v1325
        %v1389 = vunpack.c.l.b16 %v1326
        %v1390 = vpack.c.b16 %v1375, %v1374
        %v1391 = vpack.c.b16 %v1377, %v1376
        %v1392 = vpack.c.b16 %v1379, %v1378
        %v1393 = vpack.c.b16 %v1381, %v1380
        %v1394 = vpack.c.b16 %v1383, %v1382
        %v1395 = vpack.c.b16 %v1385, %v1384
        %v1396 = vpack.c.b16 %v1387, %v1386
        %v1397 = vpack.c.b16 %v1389, %v1388
        %1406 = vmatprep.subr.bf16.mxu0 0
        %1407 = vmatpush1.bf16.msra.mxu0 %v1397
        %1408 = vmatprep.subr.bf16.mxu0 0
        %1409 = vmatpush1.bf16.msra.mxu0 %v1396
        %1410 = vmatprep.subr.bf16.mxu0 0
        %1411 = vmatpush1.bf16.msra.mxu0 %v1395
        %1412 = vmatprep.subr.bf16.mxu0 0
        %1413 = vmatpush1.bf16.msra.mxu0 %v1394
        %1414 = vmatprep.subr.bf16.mxu0 0
        %1415 = vmatpush1.bf16.msra.mxu0 %v1393
        %1416 = vmatprep.subr.bf16.mxu0 0
        %1417 = vmatpush1.bf16.msra.mxu0 %v1392
        %1418 = vmatprep.subr.bf16.mxu0 0
        %1419 = vmatpush1.bf16.msra.mxu0 %v1391
        %1420 = vmatprep.subr.bf16.mxu0 0
        %1421 = vmatpush1.bf16.msra.mxu0 %v1390
        %1422 = vmatprep.subr.bf16.mxu0 0
        %1423 = vmatpush2.bf16.msra.mxu0 0
        %1424 = vmatprep.subr.bf16.mxu0 0
        %1425 = vmatpush2.bf16.msra.mxu0 0
        %1426 = vmatprep.subr.bf16.mxu0 0
        %1427 = vmatpush2.bf16.msra.mxu0 0
        %1428 = vmatprep.subr.bf16.mxu0 0
        %1429 = vmatpush2.bf16.msra.mxu0 0
        %1430 = vmatprep.subr.bf16.mxu0 0
        %1431 = vmatpush2.bf16.msra.mxu0 0
        %1432 = vmatprep.subr.bf16.mxu0 0
        %1433 = vmatpush2.bf16.msra.mxu0 0
        %1434 = vmatprep.subr.bf16.mxu0 0
        %1435 = vmatpush2.bf16.msra.mxu0 0
        %1436 = vmatprep.subr.bf16.mxu0 0
        %1437 = vmatpush2.bf16.msra.mxu0 0
        %1438 = vmatprep.mubr.bf16.mxu0 0
        %1439 = vmatmul.mubr.bf16.gmra.mxu0 %v1350
        %v1440 = vpop.f32.mrf.mxu0
        %v1441 = vadd.f32 %v1332, %v1440
        %v1442 = vpop.f32.mrf.mxu0
        %v1443 = vpop.f32.mrf.mxu0
        %v1444 = vadd.f32 %v1332, %v1443
        %v1445 = vpop.f32.mrf.mxu0
        %1446 = vmatprep.mubr.bf16.mxu0 0
        %1447 = vmatmul.mubr.bf16.gmra.mxu0 %v1351
        %v1448 = vpop.f32.mrf.mxu0
        %v1449 = vadd.f32 %v1332, %v1448
        %v1450 = vpop.f32.mrf.mxu0
        %v1451 = vpop.f32.mrf.mxu0
        %v1452 = vadd.f32 %v1332, %v1451
        %v1453 = vpop.f32.mrf.mxu0
        %1454 = vmatprep.mubr.bf16.mxu0 0
        %1455 = vmatmul.mubr.bf16.gmra.mxu0 %v1352
        %v1456 = vpop.f32.mrf.mxu0
        %v1457 = vadd.f32 %v1332, %v1456
        %v1458 = vpop.f32.mrf.mxu0
        %v1459 = vpop.f32.mrf.mxu0
        %v1460 = vadd.f32 %v1332, %v1459
        %v1461 = vpop.f32.mrf.mxu0
        %1462 = vmatprep.mubr.bf16.mxu0 0
        %1463 = vmatmul.mubr.bf16.gmra.mxu0 %v1353
        %v1464 = vpop.f32.mrf.mxu0
        %v1465 = vadd.f32 %v1332, %v1464
        %v1466 = vpop.f32.mrf.mxu0
        %v1467 = vpop.f32.mrf.mxu0
        %v1468 = vadd.f32 %v1332, %v1467
        %v1469 = vpop.f32.mrf.mxu0
        %1470 = vdwg.mxu0
        %v1471 = vlaneseq
        %v1472 = vand.u32 %v1471, 127
        %vm1473 = vcmp.lt.s32.totalorder %v1472, 7
        %v1474 = vsel %vm1473, %v1441, -inf
        %v1475 = vsel %vm1473, %v1444, -inf
        %v1476 = vsel %vm1473, %v1449, -inf
        %v1477 = vsel %vm1473, %v1452, -inf
        %v1478 = vsel %vm1473, %v1457, -inf
        %v1479 = vsel %vm1473, %v1460, -inf
        %v1480 = vsel %vm1473, %v1465, -inf
        %v1481 = vsel %vm1473, %v1468, -inf
        %1482 = vmax.xlane.f32.xlu0 %v1474
        %v1483 = vpop.xlane.xlu0 %1482
        %1484 = vmax.xlane.f32.xlu0 %v1475
        %v1485 = vpop.xlane.xlu0 %1484
        %1486 = vmax.xlane.f32.xlu0 %v1476
        %v1487 = vpop.xlane.xlu0 %1486
        %1488 = vmax.xlane.f32.xlu0 %v1477
        %v1489 = vpop.xlane.xlu0 %1488
        %1490 = vmax.xlane.f32.xlu0 %v1478
        %v1491 = vpop.xlane.xlu0 %1490
        %1492 = vmax.xlane.f32.xlu0 %v1479
        %v1493 = vpop.xlane.xlu0 %1492
        %1494 = vmax.xlane.f32.xlu0 %v1480
        %v1495 = vpop.xlane.xlu0 %1494
        %1496 = vmax.xlane.f32.xlu0 %v1481
        %v1497 = vpop.xlane.xlu0 %1496
        %v1498 = vsub.f32 %v1474, %v1483
        %v1499 = vsub.f32 %v1475, %v1485
        %v1500 = vsub.f32 %v1476, %v1487
        %v1501 = vsub.f32 %v1477, %v1489
        %v1502 = vsub.f32 %v1478, %v1491
        %v1503 = vsub.f32 %v1479, %v1493
        %v1504 = vsub.f32 %v1480, %v1495
        %v1505 = vsub.f32 %v1481, %v1497
        %v1506 = vmul.f32 %v1498, 1.442695
        %v1507 = vpow.pop %v1506
        %v1508 = vmul.f32 %v1499, 1.442695
        %v1509 = vpow.pop %v1508
        %v1510 = vmul.f32 %v1500, 1.442695
        %v1511 = vpow.pop %v1510
        %v1512 = vmul.f32 %v1501, 1.442695
        %v1513 = vpow.pop %v1512
        %v1514 = vmul.f32 %v1502, 1.442695
        %v1515 = vpow.pop %v1514
        %v1516 = vmul.f32 %v1503, 1.442695
        %v1517 = vpow.pop %v1516
        %v1518 = vmul.f32 %v1504, 1.442695
        %v1519 = vpow.pop %v1518
        %v1520 = vmul.f32 %v1505, 1.442695
        %v1521 = vpow.pop %v1520
        %1522 = vadd.xlane.f32.xlu0 %v1507
        %v1523 = vpop.xlane.xlu0 %1522
        %1524 = vadd.xlane.f32.xlu0 %v1509
        %v1525 = vpop.xlane.xlu0 %1524
        %1526 = vadd.xlane.f32.xlu0 %v1511
        %v1527 = vpop.xlane.xlu0 %1526
        %1528 = vadd.xlane.f32.xlu0 %v1513
        %v1529 = vpop.xlane.xlu0 %1528
        %1530 = vadd.xlane.f32.xlu0 %v1515
        %v1531 = vpop.xlane.xlu0 %1530
        %1532 = vadd.xlane.f32.xlu0 %v1517
        %v1533 = vpop.xlane.xlu0 %1532
        %1534 = vadd.xlane.f32.xlu0 %v1519
        %v1535 = vpop.xlane.xlu0 %1534
        %1536 = vadd.xlane.f32.xlu0 %v1521
        %v1537 = vpop.xlane.xlu0 %1536
        %v1538 = vlog2.pop %v1523
        %v1539 = vmul.f32 %v1538, 0.6931472
        %v1540 = vlog2.pop %v1525
        %v1541 = vmul.f32 %v1540, 0.6931472
        %v1542 = vlog2.pop %v1527
        %v1543 = vmul.f32 %v1542, 0.6931472
        %v1544 = vlog2.pop %v1529
        %v1545 = vmul.f32 %v1544, 0.6931472
        %v1546 = vlog2.pop %v1531
        %v1547 = vmul.f32 %v1546, 0.6931472
        %v1548 = vlog2.pop %v1533
        %v1549 = vmul.f32 %v1548, 0.6931472
        %v1550 = vlog2.pop %v1535
        %v1551 = vmul.f32 %v1550, 0.6931472
        %v1552 = vlog2.pop %v1537
        %v1553 = vmul.f32 %v1552, 0.6931472
        %v1554 = vsub.f32 %v1498, %v1539
        %v1555 = vsub.f32 %v1499, %v1541
        %v1556 = vsub.f32 %v1500, %v1543
        %v1557 = vsub.f32 %v1501, %v1545
        %v1558 = vsub.f32 %v1502, %v1547
        %v1559 = vsub.f32 %v1503, %v1549
        %v1560 = vsub.f32 %v1504, %v1551
        %v1561 = vsub.f32 %v1505, %v1553
        %s1562 = scalar_lea.vmem %s8, %s284
        %1563 = vst [vmem:[%s1562] sm:$0xff] %v1554
        %1564 = vst [vmem:[%s1562 + $0x8] sm:$0xff] %v1555
        %1565 = vst [vmem:[%s1562 + $0x10] sm:$0xff] %v1556
        %1566 = vst [vmem:[%s1562 + $0x18] sm:$0xff] %v1557
        %1567 = vst [vmem:[%s1562 + $0x20] sm:$0xff] %v1558
        %1568 = vst [vmem:[%s1562 + $0x28] sm:$0xff] %v1559
        %1569 = vst [vmem:[%s1562 + $0x30] sm:$0xff] %v1560
        %1570 = vst [vmem:[%s1562 + $0x38] sm:$0xff] %v1561
      $region68: #{gcn_forward.1} parent=51 // pred_fallthru
        _
      // Predicated region
      $region69: #{gcn_forward.1} parent=51 // pred_check
        %p1571 = pneg %p212
      $region70: #{gcn_forward.1} parent=51 // pred_check_branch
        %1573 = sbr.rel (%p1571) target = $region72
      $region71: #{gcn_forward.1} parent=51 // pred_region
        _
      $region72: #{gcn_forward.1} parent=51 // pred_fallthru
        _
      // Predicated region
      $region73: #{gcn_forward.1} parent=51 // pred_check
        %p1574 = pneg %p212
      $region74: #{gcn_forward.1} parent=51 // pred_check_branch
        %1576 = sbr.rel (%p1574) target = $region76
      $region75: #{gcn_forward.1} parent=51 // pred_region
        _
      $region76: #{gcn_forward.1} parent=51 // pred_fallthru
        _
    $region52: #{gcn_forward.1} parent=5 // pred_fallthru
      _
    %p1577 = scmp.le.s32.totalorder 2, %s14
    // Predicated region
    $region77: #{gcn_forward.1} parent=5 // pred_check
      %p1578 = pneg %p1577
    $region78: #{gcn_forward.1} parent=5 // pred_check_branch
      %1580 = sbr.rel (%p1578) target = $region80
    $region79: #{gcn_forward.1} parent=5 // pred_region
      %s1581 = ssub.s32 %s14, 2
    $region80: #{gcn_forward.1} parent=5 // pred_fallthru
      _
  $region6: #{gcn_forward.1} parent=0 // loop_footer
    %s18 = sadd.s32 1, %s14
  $region7: #{gcn_forward.1} parent=0 // loop_footer_branch
    %13 = sbr.rel target = $region3
  $region8: #{gcn_forward.1} parent=0 // loop_exit
    _

</llo_original>
